<compile_context>
chip_gen: v7x
topology: tpu7x:2x2x1
jax: 0.10.0
libtpu: 0.0.40
codegen_flags: <defaults>
</compile_context>

<pallas_src>
import functools

import jax
import jax.numpy as jnp
from jax.experimental import pallas as pl
from jax.experimental.pallas import tpu as pltpu


# ---------------------------------------------------------------------------
# Exact-GELU helper: erf via Abramowitz & Stegun 7.1.26 (|err| < 1.5e-7).
# Uses only abs / exp / mul / add, all of which lower cleanly on the VPU/EUP.
# ---------------------------------------------------------------------------
_ERF_A1 = 0.254829592
_ERF_A2 = -0.284496736
_ERF_A3 = 1.421413741
_ERF_A4 = -1.453152027
_ERF_A5 = 1.061405429
_ERF_P = 0.3275911
_INV_SQRT2 = 0.7071067811865476


def _erf_approx(z):
    sgn = jnp.where(z >= 0.0, 1.0, -1.0)
    az = jnp.abs(z)
    t = 1.0 / (1.0 + _ERF_P * az)
    poly = ((((_ERF_A5 * t + _ERF_A4) * t + _ERF_A3) * t + _ERF_A2) * t + _ERF_A1) * t
    return sgn * (1.0 - poly * jnp.exp(-az * az))


def _gelu_exact(z):
    # Matches torch.nn.GELU() (erf formulation) to ~1e-7.
    return 0.5 * z * (1.0 + _erf_approx(z * _INV_SQRT2))


# ---------------------------------------------------------------------------
# Fused Block kernel: one grid step == one batch element.
# ---------------------------------------------------------------------------
def _block_kernel(x_ref, ln1w_ref, ln1b_ref, qkvw_ref, qkvb_ref,
                  projw_ref, projb_ref, ln2w_ref, ln2b_ref,
                  fc1w_ref, fc1b_ref, fc2w_ref, fc2b_ref,
                  out_ref, attn_ref, *, num_heads, scale, eps):
    x = x_ref[0].astype(jnp.float32)                 # (N, C)
    n_tok, dim = x.shape
    head_dim = dim // num_heads

    # ---- LayerNorm 1 ----
    mu = jnp.mean(x, axis=-1, keepdims=True)
    xc = x - mu
    var = jnp.mean(xc * xc, axis=-1, keepdims=True)
    h = xc * jax.lax.rsqrt(var + eps) * ln1w_ref[...] + ln1b_ref[...]

    # ---- QKV projection (weights pre-transposed to (C, 3C)) ----
    qkv = jnp.dot(h, qkvw_ref[...], preferred_element_type=jnp.float32) + qkvb_ref[...]
    q = qkv[:, :dim]
    k = qkv[:, dim:2 * dim]
    v = qkv[:, 2 * dim:]

    # ---- per-head scaled dot-product attention (mask=None path) ----
    ctx_heads = []
    for hh in range(num_heads):
        sl = slice(hh * head_dim, (hh + 1) * head_dim)
        qh = q[:, sl]
        kh = k[:, sl]
        vh = v[:, sl]
        logits = jnp.dot(qh, kh.T, preferred_element_type=jnp.float32) * scale  # (N, N)
        logits = logits - jnp.max(logits, axis=-1, keepdims=True)
        p = jnp.exp(logits)
        p = p / jnp.sum(p, axis=-1, keepdims=True)
        attn_ref[0, hh] = p.astype(attn_ref.dtype)
        ctx_heads.append(jnp.dot(p, vh, preferred_element_type=jnp.float32))
    ctx = jnp.concatenate(ctx_heads, axis=-1)        # (N, C)

    # ---- output projection + residual ----
    attn_out = jnp.dot(ctx, projw_ref[...], preferred_element_type=jnp.float32) + projb_ref[...]
    x1 = x + attn_out

    # ---- LayerNorm 2 ----
    mu2 = jnp.mean(x1, axis=-1, keepdims=True)
    xc2 = x1 - mu2
    var2 = jnp.mean(xc2 * xc2, axis=-1, keepdims=True)
    h2 = xc2 * jax.lax.rsqrt(var2 + eps) * ln2w_ref[...] + ln2b_ref[...]

    # ---- MLP: fc1 -> GELU(exact) -> fc2, then residual ----
    m = jnp.dot(h2, fc1w_ref[...], preferred_element_type=jnp.float32) + fc1b_ref[...]
    m = _gelu_exact(m)
    y = jnp.dot(m, fc2w_ref[...], preferred_element_type=jnp.float32) + fc2b_ref[...]

    out_ref[0] = (x1 + y).astype(out_ref.dtype)


def block_forward(x, ln1_w, ln1_b, qkv_w, qkv_b, proj_w, proj_b,
                  ln2_w, ln2_b, fc1_w, fc1_b, fc2_w, fc2_b,
                  *, num_heads, eps=1e-5):
    """Forward pass of `Block` (eval mode, mask=None). Weights in PyTorch layout."""
    B, N, C = x.shape
    D = C // num_heads
    scale = D ** -0.5
    Hm = fc1_w.shape[0]

    # One-time layout glue: Linear weights (out, in) -> (in, out), biases -> (1, out).
    qkv_wt = jnp.transpose(qkv_w)        # (C, 3C)
    proj_wt = jnp.transpose(proj_w)      # (C, C)
    fc1_wt = jnp.transpose(fc1_w)        # (C, Hm)
    fc2_wt = jnp.transpose(fc2_w)        # (Hm, C)

    kernel = functools.partial(_block_kernel, num_heads=num_heads,
                               scale=scale, eps=eps)

    flops = B * (2 * N * C * 3 * C            # qkv
                 + 4 * N * N * C              # q@k^T and attn@v over all heads
                 + 2 * N * C * C              # proj
                 + 4 * N * C * Hm)            # fc1 + fc2
    transcendentals = B * (num_heads * N * N + N * Hm)
    bytes_accessed = 4 * (2 * B * N * C + B * num_heads * N * N
                          + 3 * C * C + 3 * C + C * C + C
                          + 4 * C + 2 * C * Hm + Hm + C)

    cost = pl.CostEstimate(flops=flops, transcendentals=transcendentals,
                           bytes_accessed=bytes_accessed)

    const2d = lambda b: (0, 0)
    out, attn = pl.pallas_call(
        kernel,
        out_shape=(
            jax.ShapeDtypeStruct((B, N, C), x.dtype),
            jax.ShapeDtypeStruct((B, num_heads, N, N), x.dtype),
        ),
        grid_spec=pltpu.PrefetchScalarGridSpec(
            num_scalar_prefetch=0,
            grid=(B,),
            in_specs=[
                pl.BlockSpec((1, N, C), lambda b: (b, 0, 0)),   # x
                pl.BlockSpec((1, C), const2d),                  # ln1 weight
                pl.BlockSpec((1, C), const2d),                  # ln1 bias
                pl.BlockSpec((C, 3 * C), const2d),              # qkv weight (in, out)
                pl.BlockSpec((1, 3 * C), const2d),              # qkv bias
                pl.BlockSpec((C, C), const2d),                  # proj weight
                pl.BlockSpec((1, C), const2d),                  # proj bias
                pl.BlockSpec((1, C), const2d),                  # ln2 weight
                pl.BlockSpec((1, C), const2d),                  # ln2 bias
                pl.BlockSpec((C, Hm), const2d),                 # fc1 weight
                pl.BlockSpec((1, Hm), const2d),                 # fc1 bias
                pl.BlockSpec((Hm, C), const2d),                 # fc2 weight
                pl.BlockSpec((1, C), const2d),                  # fc2 bias
            ],
            out_specs=[
                pl.BlockSpec((1, N, C), lambda b: (b, 0, 0)),
                pl.BlockSpec((1, num_heads, N, N), lambda b: (b, 0, 0, 0)),
            ],
        ),
        compiler_params=pltpu.CompilerParams(
            dimension_semantics=("parallel",)),
        cost_estimate=cost,
    )(x, ln1_w.reshape(1, C), ln1_b.reshape(1, C),
      qkv_wt, qkv_b.reshape(1, 3 * C),
      proj_wt, proj_b.reshape(1, C),
      ln2_w.reshape(1, C), ln2_b.reshape(1, C),
      fc1_wt, fc1_b.reshape(1, Hm),
      fc2_wt, fc2_b.reshape(1, C))
    return out, attn


# ---------------------------------------------------------------------------
# Pure-JAX reference (same semantics as the PyTorch Block in eval mode).
# ---------------------------------------------------------------------------
def block_reference(x, ln1_w, ln1_b, qkv_w, qkv_b, proj_w, proj_b,
                    ln2_w, ln2_b, fc1_w, fc1_b, fc2_w, fc2_b,
                    *, num_heads, eps=1e-5):
    B, N, C = x.shape
    D = C // num_heads
    scale = D ** -0.5

    def ln(z, w, b):
        mu = jnp.mean(z, axis=-1, keepdims=True)
        var = jnp.mean((z - mu) ** 2, axis=-1, keepdims=True)
        return (z - mu) / jnp.sqrt(var + eps) * w + b

    h = ln(x, ln1_w, ln1_b)
    qkv = h @ qkv_w.T + qkv_b                                   # (B, N, 3C)
    qkv = qkv.reshape(B, N, 3, num_heads, D).transpose(2, 0, 3, 1, 4)
    q, k, v = qkv[0], qkv[1], qkv[2]
    attn = jnp.einsum("bhnd,bhmd->bhnm", q, k) * scale
    attn = jax.nn.softmax(attn, axis=-1)
    ctx = jnp.einsum("bhnm,bhmd->bhnd", attn, v)
    ctx = ctx.transpose(0, 2, 1, 3).reshape(B, N, C)
    x1 = x + ctx @ proj_w.T + proj_b
    h2 = ln(x1, ln2_w, ln2_b)
    m = h2 @ fc1_w.T + fc1_b
    m = 0.5 * m * (1.0 + jax.lax.erf(m * _INV_SQRT2))           # exact GELU
    y = m @ fc2_w.T + fc2_b
    return x1 + y, attn


if __name__ == "__main__":
    # Small shapes consistent with the module: batch=2, seq=8, dim=32, heads=4,
    # mlp_ratio=4 -> hidden=128. qkv_bias=False (module default) -> zero bias.
    B, N, C, H = 2, 8, 32, 4
    Hm = int(C * 4.0)

    key = jax.random.PRNGKey(0)
    ks = jax.random.split(key, 12)
    x = jax.random.normal(ks[0], (B, N, C), dtype=jnp.float32)

    ln1_w = 1.0 + 0.1 * jax.random.normal(ks[1], (C,), dtype=jnp.float32)
    ln1_b = 0.1 * jax.random.normal(ks[2], (C,), dtype=jnp.float32)
    qkv_w = 0.05 * jax.random.normal(ks[3], (3 * C, C), dtype=jnp.float32)
    qkv_b = jnp.zeros((3 * C,), dtype=jnp.float32)      # qkv_bias=False
    proj_w = 0.05 * jax.random.normal(ks[4], (C, C), dtype=jnp.float32)
    proj_b = 0.05 * jax.random.normal(ks[5], (C,), dtype=jnp.float32)
    ln2_w = 1.0 + 0.1 * jax.random.normal(ks[6], (C,), dtype=jnp.float32)
    ln2_b = 0.1 * jax.random.normal(ks[7], (C,), dtype=jnp.float32)
    fc1_w = 0.05 * jax.random.normal(ks[8], (Hm, C), dtype=jnp.float32)
    fc1_b = 0.05 * jax.random.normal(ks[9], (Hm,), dtype=jnp.float32)
    fc2_w = 0.05 * jax.random.normal(ks[10], (C, Hm), dtype=jnp.float32)
    fc2_b = 0.05 * jax.random.normal(ks[11], (C,), dtype=jnp.float32)

    args = (x, ln1_w, ln1_b, qkv_w, qkv_b, proj_w, proj_b,
            ln2_w, ln2_b, fc1_w, fc1_b, fc2_w, fc2_b)

    out, attn = block_forward(*args, num_heads=H)
    out = jax.block_until_ready(out)
    attn = jax.block_until_ready(attn)

    out_ref, attn_ref = block_reference(*args, num_heads=H)

    assert out.shape == (B, N, C), out.shape
    assert attn.shape == (B, H, N, N), attn.shape
    assert jnp.allclose(out, out_ref, atol=1e-4, rtol=1e-4), \
        float(jnp.max(jnp.abs(out - out_ref)))
    assert jnp.allclose(attn, attn_ref, atol=1e-4, rtol=1e-4), \
        float(jnp.max(jnp.abs(attn - attn_ref)))
    print("KERNEL_OK")
</pallas_src>

<mosaic_0001>
module attributes {stable_mosaic.version = 11 : i64} {
  func.func @_block_kernel(%arg0: i32, %arg1: memref<1x8x32xf32, #tpu.memory_space<vmem>>, %arg2: memref<1x32xf32, #tpu.memory_space<vmem>>, %arg3: memref<1x32xf32, #tpu.memory_space<vmem>>, %arg4: memref<32x96xf32, #tpu.memory_space<vmem>>, %arg5: memref<1x96xf32, #tpu.memory_space<vmem>>, %arg6: memref<32x32xf32, #tpu.memory_space<vmem>>, %arg7: memref<1x32xf32, #tpu.memory_space<vmem>>, %arg8: memref<1x32xf32, #tpu.memory_space<vmem>>, %arg9: memref<1x32xf32, #tpu.memory_space<vmem>>, %arg10: memref<32x128xf32, #tpu.memory_space<vmem>>, %arg11: memref<1x128xf32, #tpu.memory_space<vmem>>, %arg12: memref<128x32xf32, #tpu.memory_space<vmem>>, %arg13: memref<1x32xf32, #tpu.memory_space<vmem>>, %arg14: memref<1x8x32xf32, #tpu.memory_space<vmem>>, %arg15: memref<1x4x8x8xf32, #tpu.memory_space<vmem>>) attributes {dimension_semantics = [#tpu.dimension_semantics<parallel>], iteration_bounds = array<i64: 2>, scalar_prefetch = 0 : i64, scratch_operands = 0 : i64, tpu.core_type = #tpu.core_type<tc>, window_params = [{transform_indices = @transform_0, window_bounds = array<i64: 1, 8, 32>}, {pipeline_mode = #tpu.pipeline_mode<synchronous>, transform_indices = @transform_1, window_bounds = array<i64: 1, 32>}, {pipeline_mode = #tpu.pipeline_mode<synchronous>, transform_indices = @transform_2, window_bounds = array<i64: 1, 32>}, {pipeline_mode = #tpu.pipeline_mode<synchronous>, transform_indices = @transform_3, window_bounds = array<i64: 32, 96>}, {pipeline_mode = #tpu.pipeline_mode<synchronous>, transform_indices = @transform_4, window_bounds = array<i64: 1, 96>}, {pipeline_mode = #tpu.pipeline_mode<synchronous>, transform_indices = @transform_5, window_bounds = array<i64: 32, 32>}, {pipeline_mode = #tpu.pipeline_mode<synchronous>, transform_indices = @transform_6, window_bounds = array<i64: 1, 32>}, {pipeline_mode = #tpu.pipeline_mode<synchronous>, transform_indices = @transform_7, window_bounds = array<i64: 1, 32>}, {pipeline_mode = #tpu.pipeline_mode<synchronous>, transform_indices = @transform_8, window_bounds = array<i64: 1, 32>}, {pipeline_mode = #tpu.pipeline_mode<synchronous>, transform_indices = @transform_9, window_bounds = array<i64: 32, 128>}, {pipeline_mode = #tpu.pipeline_mode<synchronous>, transform_indices = @transform_10, window_bounds = array<i64: 1, 128>}, {pipeline_mode = #tpu.pipeline_mode<synchronous>, transform_indices = @transform_11, window_bounds = array<i64: 128, 32>}, {pipeline_mode = #tpu.pipeline_mode<synchronous>, transform_indices = @transform_12, window_bounds = array<i64: 1, 32>}, {transform_indices = @transform_13, window_bounds = array<i64: 1, 8, 32>}, {transform_indices = @transform_14, window_bounds = array<i64: 1, 4, 8, 8>}]} {
    %c0 = arith.constant 0 : index
    %c0_0 = arith.constant 0 : index
    %c0_1 = arith.constant 0 : index
    %0 = vector.load %arg1[%c0, %c0_0, %c0_1] : memref<1x8x32xf32, #tpu.memory_space<vmem>>, vector<1x8x32xf32>
    %1 = vector.shape_cast %0 : vector<1x8x32xf32> to vector<8x32xf32>
    %cst = arith.constant dense<0.000000e+00> : vector<8xf32>
    %2 = vector.multi_reduction <add>, %1, %cst [1] : vector<8x32xf32> to vector<8xf32>
    %3 = vector.shape_cast %2 : vector<8xf32> to vector<8x1xf32>
    %cst_2 = arith.constant 3.200000e+01 : f32
    %4 = vector.broadcast %cst_2 : f32 to vector<8x1xf32>
    %5 = arith.divf %3, %4 : vector<8x1xf32>
    %6 = vector.broadcast %5 : vector<8x1xf32> to vector<8x32xf32>
    %7 = arith.subf %1, %6 : vector<8x32xf32>
    %8 = arith.mulf %7, %7 : vector<8x32xf32>
    %cst_3 = arith.constant dense<0.000000e+00> : vector<8xf32>
    %9 = vector.multi_reduction <add>, %8, %cst_3 [1] : vector<8x32xf32> to vector<8xf32>
    %10 = vector.shape_cast %9 : vector<8xf32> to vector<8x1xf32>
    %cst_4 = arith.constant 3.200000e+01 : f32
    %11 = vector.broadcast %cst_4 : f32 to vector<8x1xf32>
    %12 = arith.divf %10, %11 : vector<8x1xf32>
    %cst_5 = arith.constant 9.99999974E-6 : f32
    %13 = vector.broadcast %cst_5 : f32 to vector<8x1xf32>
    %14 = arith.addf %12, %13 : vector<8x1xf32>
    %15 = math.rsqrt %14 : vector<8x1xf32>
    %16 = vector.broadcast %15 : vector<8x1xf32> to vector<8x32xf32>
    %17 = arith.mulf %7, %16 : vector<8x32xf32>
    %c0_6 = arith.constant 0 : index
    %c0_7 = arith.constant 0 : index
    %18 = vector.load %arg2[%c0_6, %c0_7] : memref<1x32xf32, #tpu.memory_space<vmem>>, vector<1x32xf32>
    %19 = vector.broadcast %18 : vector<1x32xf32> to vector<8x32xf32>
    %20 = arith.mulf %17, %19 : vector<8x32xf32>
    %c0_8 = arith.constant 0 : index
    %c0_9 = arith.constant 0 : index
    %21 = vector.load %arg3[%c0_8, %c0_9] : memref<1x32xf32, #tpu.memory_space<vmem>>, vector<1x32xf32>
    %22 = vector.broadcast %21 : vector<1x32xf32> to vector<8x32xf32>
    %23 = arith.addf %20, %22 : vector<8x32xf32>
    %c0_10 = arith.constant 0 : index
    %c0_11 = arith.constant 0 : index
    %24 = vector.load %arg4[%c0_10, %c0_11] : memref<32x96xf32, #tpu.memory_space<vmem>>, vector<32x96xf32>
    %cst_12 = arith.constant dense<0.000000e+00> : vector<8x96xf32>
    %25 = tpu.matmul %23, %24, %cst_12 {dimension_numbers = #tpu.dot_dimension_numbers<[1], [0], [0], [1], [0, 0, 1, 1], [], []>} : vector<8x32xf32>, vector<32x96xf32>, vector<8x96xf32> -> vector<8x96xf32>
    %c0_13 = arith.constant 0 : index
    %c0_14 = arith.constant 0 : index
    %26 = vector.load %arg5[%c0_13, %c0_14] : memref<1x96xf32, #tpu.memory_space<vmem>>, vector<1x96xf32>
    %27 = vector.broadcast %26 : vector<1x96xf32> to vector<8x96xf32>
    %28 = arith.addf %25, %27 : vector<8x96xf32>
    %29 = vector.extract_strided_slice %28 {offsets = [0, 0], sizes = [8, 32], strides = [1, 1]} : vector<8x96xf32> to vector<8x32xf32>
    %30 = vector.extract_strided_slice %28 {offsets = [0, 32], sizes = [8, 32], strides = [1, 1]} : vector<8x96xf32> to vector<8x32xf32>
    %31 = vector.extract_strided_slice %28 {offsets = [0, 64], sizes = [8, 32], strides = [1, 1]} : vector<8x96xf32> to vector<8x32xf32>
    %32 = vector.extract_strided_slice %29 {offsets = [0, 0], sizes = [8, 8], strides = [1, 1]} : vector<8x32xf32> to vector<8x8xf32>
    %33 = vector.extract_strided_slice %30 {offsets = [0, 0], sizes = [8, 8], strides = [1, 1]} : vector<8x32xf32> to vector<8x8xf32>
    %34 = vector.extract_strided_slice %31 {offsets = [0, 0], sizes = [8, 8], strides = [1, 1]} : vector<8x32xf32> to vector<8x8xf32>
    %35 = tpu.transpose %33, [1, 0] : vector<8x8xf32> -> vector<8x8xf32>
    %cst_15 = arith.constant dense<0.000000e+00> : vector<8x8xf32>
    %36 = tpu.matmul %32, %35, %cst_15 {dimension_numbers = #tpu.dot_dimension_numbers<[1], [0], [0], [1], [0, 0, 1, 1], [], []>} : vector<8x8xf32>, vector<8x8xf32>, vector<8x8xf32> -> vector<8x8xf32>
    %cst_16 = arith.constant 0.353553385 : f32
    %37 = vector.broadcast %cst_16 : f32 to vector<8x8xf32>
    %38 = arith.mulf %36, %37 : vector<8x8xf32>
    %cst_17 = arith.constant dense<0xFF800000> : vector<8xf32>
    %39 = vector.multi_reduction <maximumf>, %38, %cst_17 [1] : vector<8x8xf32> to vector<8xf32>
    %40 = vector.shape_cast %39 : vector<8xf32> to vector<8x1xf32>
    %41 = vector.broadcast %40 : vector<8x1xf32> to vector<8x8xf32>
    %42 = arith.subf %38, %41 : vector<8x8xf32>
    %43 = math.exp %42 : vector<8x8xf32>
    %cst_18 = arith.constant dense<0.000000e+00> : vector<8xf32>
    %44 = vector.multi_reduction <add>, %43, %cst_18 [1] : vector<8x8xf32> to vector<8xf32>
    %45 = vector.shape_cast %44 : vector<8xf32> to vector<8x1xf32>
    %46 = vector.broadcast %45 : vector<8x1xf32> to vector<8x8xf32>
    %47 = arith.divf %43, %46 : vector<8x8xf32>
    %c0_19 = arith.constant 0 : index
    %c0_20 = arith.constant 0 : index
    %c0_21 = arith.constant 0 : index
    %c0_22 = arith.constant 0 : index
    %48 = vector.load %arg15[%c0_19, %c0_20, %c0_21, %c0_22] : memref<1x4x8x8xf32, #tpu.memory_space<vmem>>, vector<1x1x8x8xf32>
    %49 = vector.shape_cast %48 : vector<1x1x8x8xf32> to vector<8x8xf32>
    %50 = vector.shape_cast %47 : vector<8x8xf32> to vector<1x1x8x8xf32>
    tpu.vector_store %arg15[%c0_19, %c0_20, %c0_21, %c0_22], %50 {strides = array<i32>} : memref<1x4x8x8xf32, #tpu.memory_space<vmem>>, vector<1x1x8x8xf32>,
    %cst_23 = arith.constant dense<0.000000e+00> : vector<8x8xf32>
    %51 = tpu.matmul %47, %34, %cst_23 {dimension_numbers = #tpu.dot_dimension_numbers<[1], [0], [0], [1], [0, 0, 1, 1], [], []>} : vector<8x8xf32>, vector<8x8xf32>, vector<8x8xf32> -> vector<8x8xf32>
    %52 = vector.extract_strided_slice %29 {offsets = [0, 8], sizes = [8, 8], strides = [1, 1]} : vector<8x32xf32> to vector<8x8xf32>
    %53 = vector.extract_strided_slice %30 {offsets = [0, 8], sizes = [8, 8], strides = [1, 1]} : vector<8x32xf32> to vector<8x8xf32>
    %54 = vector.extract_strided_slice %31 {offsets = [0, 8], sizes = [8, 8], strides = [1, 1]} : vector<8x32xf32> to vector<8x8xf32>
    %55 = tpu.transpose %53, [1, 0] : vector<8x8xf32> -> vector<8x8xf32>
    %cst_24 = arith.constant dense<0.000000e+00> : vector<8x8xf32>
    %56 = tpu.matmul %52, %55, %cst_24 {dimension_numbers = #tpu.dot_dimension_numbers<[1], [0], [0], [1], [0, 0, 1, 1], [], []>} : vector<8x8xf32>, vector<8x8xf32>, vector<8x8xf32> -> vector<8x8xf32>
    %cst_25 = arith.constant 0.353553385 : f32
    %57 = vector.broadcast %cst_25 : f32 to vector<8x8xf32>
    %58 = arith.mulf %56, %57 : vector<8x8xf32>
    %cst_26 = arith.constant dense<0xFF800000> : vector<8xf32>
    %59 = vector.multi_reduction <maximumf>, %58, %cst_26 [1] : vector<8x8xf32> to vector<8xf32>
    %60 = vector.shape_cast %59 : vector<8xf32> to vector<8x1xf32>
    %61 = vector.broadcast %60 : vector<8x1xf32> to vector<8x8xf32>
    %62 = arith.subf %58, %61 : vector<8x8xf32>
    %63 = math.exp %62 : vector<8x8xf32>
    %cst_27 = arith.constant dense<0.000000e+00> : vector<8xf32>
    %64 = vector.multi_reduction <add>, %63, %cst_27 [1] : vector<8x8xf32> to vector<8xf32>
    %65 = vector.shape_cast %64 : vector<8xf32> to vector<8x1xf32>
    %66 = vector.broadcast %65 : vector<8x1xf32> to vector<8x8xf32>
    %67 = arith.divf %63, %66 : vector<8x8xf32>
    %c0_28 = arith.constant 0 : index
    %c1 = arith.constant 1 : index
    %c0_29 = arith.constant 0 : index
    %c0_30 = arith.constant 0 : index
    %68 = vector.load %arg15[%c0_28, %c1, %c0_29, %c0_30] : memref<1x4x8x8xf32, #tpu.memory_space<vmem>>, vector<1x1x8x8xf32>
    %69 = vector.shape_cast %68 : vector<1x1x8x8xf32> to vector<8x8xf32>
    %70 = vector.shape_cast %67 : vector<8x8xf32> to vector<1x1x8x8xf32>
    tpu.vector_store %arg15[%c0_28, %c1, %c0_29, %c0_30], %70 {strides = array<i32>} : memref<1x4x8x8xf32, #tpu.memory_space<vmem>>, vector<1x1x8x8xf32>,
    %cst_31 = arith.constant dense<0.000000e+00> : vector<8x8xf32>
    %71 = tpu.matmul %67, %54, %cst_31 {dimension_numbers = #tpu.dot_dimension_numbers<[1], [0], [0], [1], [0, 0, 1, 1], [], []>} : vector<8x8xf32>, vector<8x8xf32>, vector<8x8xf32> -> vector<8x8xf32>
    %72 = vector.extract_strided_slice %29 {offsets = [0, 16], sizes = [8, 8], strides = [1, 1]} : vector<8x32xf32> to vector<8x8xf32>
    %73 = vector.extract_strided_slice %30 {offsets = [0, 16], sizes = [8, 8], strides = [1, 1]} : vector<8x32xf32> to vector<8x8xf32>
    %74 = vector.extract_strided_slice %31 {offsets = [0, 16], sizes = [8, 8], strides = [1, 1]} : vector<8x32xf32> to vector<8x8xf32>
    %75 = tpu.transpose %73, [1, 0] : vector<8x8xf32> -> vector<8x8xf32>
    %cst_32 = arith.constant dense<0.000000e+00> : vector<8x8xf32>
    %76 = tpu.matmul %72, %75, %cst_32 {dimension_numbers = #tpu.dot_dimension_numbers<[1], [0], [0], [1], [0, 0, 1, 1], [], []>} : vector<8x8xf32>, vector<8x8xf32>, vector<8x8xf32> -> vector<8x8xf32>
    %cst_33 = arith.constant 0.353553385 : f32
    %77 = vector.broadcast %cst_33 : f32 to vector<8x8xf32>
    %78 = arith.mulf %76, %77 : vector<8x8xf32>
    %cst_34 = arith.constant dense<0xFF800000> : vector<8xf32>
    %79 = vector.multi_reduction <maximumf>, %78, %cst_34 [1] : vector<8x8xf32> to vector<8xf32>
    %80 = vector.shape_cast %79 : vector<8xf32> to vector<8x1xf32>
    %81 = vector.broadcast %80 : vector<8x1xf32> to vector<8x8xf32>
    %82 = arith.subf %78, %81 : vector<8x8xf32>
    %83 = math.exp %82 : vector<8x8xf32>
    %cst_35 = arith.constant dense<0.000000e+00> : vector<8xf32>
    %84 = vector.multi_reduction <add>, %83, %cst_35 [1] : vector<8x8xf32> to vector<8xf32>
    %85 = vector.shape_cast %84 : vector<8xf32> to vector<8x1xf32>
    %86 = vector.broadcast %85 : vector<8x1xf32> to vector<8x8xf32>
    %87 = arith.divf %83, %86 : vector<8x8xf32>
    %c0_36 = arith.constant 0 : index
    %c2 = arith.constant 2 : index
    %c0_37 = arith.constant 0 : index
    %c0_38 = arith.constant 0 : index
    %88 = vector.load %arg15[%c0_36, %c2, %c0_37, %c0_38] : memref<1x4x8x8xf32, #tpu.memory_space<vmem>>, vector<1x1x8x8xf32>
    %89 = vector.shape_cast %88 : vector<1x1x8x8xf32> to vector<8x8xf32>
    %90 = vector.shape_cast %87 : vector<8x8xf32> to vector<1x1x8x8xf32>
    tpu.vector_store %arg15[%c0_36, %c2, %c0_37, %c0_38], %90 {strides = array<i32>} : memref<1x4x8x8xf32, #tpu.memory_space<vmem>>, vector<1x1x8x8xf32>,
    %cst_39 = arith.constant dense<0.000000e+00> : vector<8x8xf32>
    %91 = tpu.matmul %87, %74, %cst_39 {dimension_numbers = #tpu.dot_dimension_numbers<[1], [0], [0], [1], [0, 0, 1, 1], [], []>} : vector<8x8xf32>, vector<8x8xf32>, vector<8x8xf32> -> vector<8x8xf32>
    %92 = vector.extract_strided_slice %29 {offsets = [0, 24], sizes = [8, 8], strides = [1, 1]} : vector<8x32xf32> to vector<8x8xf32>
    %93 = vector.extract_strided_slice %30 {offsets = [0, 24], sizes = [8, 8], strides = [1, 1]} : vector<8x32xf32> to vector<8x8xf32>
    %94 = vector.extract_strided_slice %31 {offsets = [0, 24], sizes = [8, 8], strides = [1, 1]} : vector<8x32xf32> to vector<8x8xf32>
    %95 = tpu.transpose %93, [1, 0] : vector<8x8xf32> -> vector<8x8xf32>
    %cst_40 = arith.constant dense<0.000000e+00> : vector<8x8xf32>
    %96 = tpu.matmul %92, %95, %cst_40 {dimension_numbers = #tpu.dot_dimension_numbers<[1], [0], [0], [1], [0, 0, 1, 1], [], []>} : vector<8x8xf32>, vector<8x8xf32>, vector<8x8xf32> -> vector<8x8xf32>
    %cst_41 = arith.constant 0.353553385 : f32
    %97 = vector.broadcast %cst_41 : f32 to vector<8x8xf32>
    %98 = arith.mulf %96, %97 : vector<8x8xf32>
    %cst_42 = arith.constant dense<0xFF800000> : vector<8xf32>
    %99 = vector.multi_reduction <maximumf>, %98, %cst_42 [1] : vector<8x8xf32> to vector<8xf32>
    %100 = vector.shape_cast %99 : vector<8xf32> to vector<8x1xf32>
    %101 = vector.broadcast %100 : vector<8x1xf32> to vector<8x8xf32>
    %102 = arith.subf %98, %101 : vector<8x8xf32>
    %103 = math.exp %102 : vector<8x8xf32>
    %cst_43 = arith.constant dense<0.000000e+00> : vector<8xf32>
    %104 = vector.multi_reduction <add>, %103, %cst_43 [1] : vector<8x8xf32> to vector<8xf32>
    %105 = vector.shape_cast %104 : vector<8xf32> to vector<8x1xf32>
    %106 = vector.broadcast %105 : vector<8x1xf32> to vector<8x8xf32>
    %107 = arith.divf %103, %106 : vector<8x8xf32>
    %c0_44 = arith.constant 0 : index
    %c3 = arith.constant 3 : index
    %c0_45 = arith.constant 0 : index
    %c0_46 = arith.constant 0 : index
    %108 = vector.load %arg15[%c0_44, %c3, %c0_45, %c0_46] : memref<1x4x8x8xf32, #tpu.memory_space<vmem>>, vector<1x1x8x8xf32>
    %109 = vector.shape_cast %108 : vector<1x1x8x8xf32> to vector<8x8xf32>
    %110 = vector.shape_cast %107 : vector<8x8xf32> to vector<1x1x8x8xf32>
    tpu.vector_store %arg15[%c0_44, %c3, %c0_45, %c0_46], %110 {strides = array<i32>} : memref<1x4x8x8xf32, #tpu.memory_space<vmem>>, vector<1x1x8x8xf32>,
    %cst_47 = arith.constant dense<0.000000e+00> : vector<8x8xf32>
    %111 = tpu.matmul %107, %94, %cst_47 {dimension_numbers = #tpu.dot_dimension_numbers<[1], [0], [0], [1], [0, 0, 1, 1], [], []>} : vector<8x8xf32>, vector<8x8xf32>, vector<8x8xf32> -> vector<8x8xf32>
    %112 = tpu.concatenate %51, %71, %91, %111 in 1 : vector<8x8xf32>, vector<8x8xf32>, vector<8x8xf32>, vector<8x8xf32> -> vector<8x32xf32>
    %c0_48 = arith.constant 0 : index
    %c0_49 = arith.constant 0 : index
    %113 = vector.load %arg6[%c0_48, %c0_49] : memref<32x32xf32, #tpu.memory_space<vmem>>, vector<32x32xf32>
    %cst_50 = arith.constant dense<0.000000e+00> : vector<8x32xf32>
    %114 = tpu.matmul %112, %113, %cst_50 {dimension_numbers = #tpu.dot_dimension_numbers<[1], [0], [0], [1], [0, 0, 1, 1], [], []>} : vector<8x32xf32>, vector<32x32xf32>, vector<8x32xf32> -> vector<8x32xf32>
    %c0_51 = arith.constant 0 : index
    %c0_52 = arith.constant 0 : index
    %115 = vector.load %arg7[%c0_51, %c0_52] : memref<1x32xf32, #tpu.memory_space<vmem>>, vector<1x32xf32>
    %116 = vector.broadcast %115 : vector<1x32xf32> to vector<8x32xf32>
    %117 = arith.addf %114, %116 : vector<8x32xf32>
    %118 = arith.addf %1, %117 : vector<8x32xf32>
    %cst_53 = arith.constant dense<0.000000e+00> : vector<8xf32>
    %119 = vector.multi_reduction <add>, %118, %cst_53 [1] : vector<8x32xf32> to vector<8xf32>
    %120 = vector.shape_cast %119 : vector<8xf32> to vector<8x1xf32>
    %cst_54 = arith.constant 3.200000e+01 : f32
    %121 = vector.broadcast %cst_54 : f32 to vector<8x1xf32>
    %122 = arith.divf %120, %121 : vector<8x1xf32>
    %123 = vector.broadcast %122 : vector<8x1xf32> to vector<8x32xf32>
    %124 = arith.subf %118, %123 : vector<8x32xf32>
    %125 = arith.mulf %124, %124 : vector<8x32xf32>
    %cst_55 = arith.constant dense<0.000000e+00> : vector<8xf32>
    %126 = vector.multi_reduction <add>, %125, %cst_55 [1] : vector<8x32xf32> to vector<8xf32>
    %127 = vector.shape_cast %126 : vector<8xf32> to vector<8x1xf32>
    %cst_56 = arith.constant 3.200000e+01 : f32
    %128 = vector.broadcast %cst_56 : f32 to vector<8x1xf32>
    %129 = arith.divf %127, %128 : vector<8x1xf32>
    %cst_57 = arith.constant 9.99999974E-6 : f32
    %130 = vector.broadcast %cst_57 : f32 to vector<8x1xf32>
    %131 = arith.addf %129, %130 : vector<8x1xf32>
    %132 = math.rsqrt %131 : vector<8x1xf32>
    %133 = vector.broadcast %132 : vector<8x1xf32> to vector<8x32xf32>
    %134 = arith.mulf %124, %133 : vector<8x32xf32>
    %c0_58 = arith.constant 0 : index
    %c0_59 = arith.constant 0 : index
    %135 = vector.load %arg8[%c0_58, %c0_59] : memref<1x32xf32, #tpu.memory_space<vmem>>, vector<1x32xf32>
    %136 = vector.broadcast %135 : vector<1x32xf32> to vector<8x32xf32>
    %137 = arith.mulf %134, %136 : vector<8x32xf32>
    %c0_60 = arith.constant 0 : index
    %c0_61 = arith.constant 0 : index
    %138 = vector.load %arg9[%c0_60, %c0_61] : memref<1x32xf32, #tpu.memory_space<vmem>>, vector<1x32xf32>
    %139 = vector.broadcast %138 : vector<1x32xf32> to vector<8x32xf32>
    %140 = arith.addf %137, %139 : vector<8x32xf32>
    %c0_62 = arith.constant 0 : index
    %c0_63 = arith.constant 0 : index
    %141 = vector.load %arg10[%c0_62, %c0_63] : memref<32x128xf32, #tpu.memory_space<vmem>>, vector<32x128xf32>
    %cst_64 = arith.constant dense<0.000000e+00> : vector<8x128xf32>
    %142 = tpu.matmul %140, %141, %cst_64 {dimension_numbers = #tpu.dot_dimension_numbers<[1], [0], [0], [1], [0, 0, 1, 1], [], []>} : vector<8x32xf32>, vector<32x128xf32>, vector<8x128xf32> -> vector<8x128xf32>
    %c0_65 = arith.constant 0 : index
    %c0_66 = arith.constant 0 : index
    %143 = vector.load %arg11[%c0_65, %c0_66] : memref<1x128xf32, #tpu.memory_space<vmem>>, vector<1x128xf32>
    %144 = vector.broadcast %143 : vector<1x128xf32> to vector<8x128xf32>
    %145 = arith.addf %142, %144 : vector<8x128xf32>
    %cst_67 = arith.constant 5.000000e-01 : f32
    %146 = vector.broadcast %cst_67 : f32 to vector<8x128xf32>
    %147 = arith.mulf %146, %145 : vector<8x128xf32>
    %cst_68 = arith.constant 0.707106769 : f32
    %148 = vector.broadcast %cst_68 : f32 to vector<8x128xf32>
    %149 = arith.mulf %145, %148 : vector<8x128xf32>
    %cst_69 = arith.constant 0.000000e+00 : f32
    %150 = vector.broadcast %cst_69 : f32 to vector<8x128xf32>
    %151 = arith.cmpf oge, %149, %150 : vector<8x128xf32>
    %cst_70 = arith.constant 1.000000e+00 : f32
    %cst_71 = arith.constant -1.000000e+00 : f32
    %152 = vector.broadcast %cst_70 : f32 to vector<8x128xf32>
    %153 = vector.broadcast %cst_71 : f32 to vector<8x128xf32>
    %154 = arith.select %151, %152, %153 : vector<8x128xi1>, vector<8x128xf32>
    %155 = math.absf %149 : vector<8x128xf32>
    %cst_72 = arith.constant 0.327591091 : f32
    %156 = vector.broadcast %cst_72 : f32 to vector<8x128xf32>
    %157 = arith.mulf %156, %155 : vector<8x128xf32>
    %cst_73 = arith.constant 1.000000e+00 : f32
    %158 = vector.broadcast %cst_73 : f32 to vector<8x128xf32>
    %159 = arith.addf %158, %157 : vector<8x128xf32>
    %cst_74 = arith.constant 1.000000e+00 : f32
    %160 = vector.broadcast %cst_74 : f32 to vector<8x128xf32>
    %161 = arith.divf %160, %159 : vector<8x128xf32>
    %cst_75 = arith.constant 1.06140542 : f32
    %162 = vector.broadcast %cst_75 : f32 to vector<8x128xf32>
    %163 = arith.mulf %162, %161 : vector<8x128xf32>
    %cst_76 = arith.constant -1.45315206 : f32
    %164 = vector.broadcast %cst_76 : f32 to vector<8x128xf32>
    %165 = arith.addf %163, %164 : vector<8x128xf32>
    %166 = arith.mulf %165, %161 : vector<8x128xf32>
    %cst_77 = arith.constant 1.42141378 : f32
    %167 = vector.broadcast %cst_77 : f32 to vector<8x128xf32>
    %168 = arith.addf %166, %167 : vector<8x128xf32>
    %169 = arith.mulf %168, %161 : vector<8x128xf32>
    %cst_78 = arith.constant -0.284496725 : f32
    %170 = vector.broadcast %cst_78 : f32 to vector<8x128xf32>
    %171 = arith.addf %169, %170 : vector<8x128xf32>
    %172 = arith.mulf %171, %161 : vector<8x128xf32>
    %cst_79 = arith.constant 0.254829586 : f32
    %173 = vector.broadcast %cst_79 : f32 to vector<8x128xf32>
    %174 = arith.addf %172, %173 : vector<8x128xf32>
    %175 = arith.mulf %174, %161 : vector<8x128xf32>
    %cst_80 = arith.constant 0.000000e+00 : f32
    %176 = vector.broadcast %cst_80 : f32 to vector<8x128xf32>
    %177 = arith.subf %176, %155 : vector<8x128xf32>
    %178 = arith.mulf %177, %155 : vector<8x128xf32>
    %179 = math.exp %178 : vector<8x128xf32>
    %180 = arith.mulf %175, %179 : vector<8x128xf32>
    %cst_81 = arith.constant 1.000000e+00 : f32
    %181 = vector.broadcast %cst_81 : f32 to vector<8x128xf32>
    %182 = arith.subf %181, %180 : vector<8x128xf32>
    %183 = arith.mulf %154, %182 : vector<8x128xf32>
    %cst_82 = arith.constant 1.000000e+00 : f32
    %184 = vector.broadcast %cst_82 : f32 to vector<8x128xf32>
    %185 = arith.addf %184, %183 : vector<8x128xf32>
    %186 = arith.mulf %147, %185 : vector<8x128xf32>
    %c0_83 = arith.constant 0 : index
    %c0_84 = arith.constant 0 : index
    %187 = vector.load %arg12[%c0_83, %c0_84] : memref<128x32xf32, #tpu.memory_space<vmem>>, vector<128x32xf32>
    %cst_85 = arith.constant dense<0.000000e+00> : vector<8x32xf32>
    %188 = tpu.matmul %186, %187, %cst_85 {dimension_numbers = #tpu.dot_dimension_numbers<[1], [0], [0], [1], [0, 0, 1, 1], [], []>} : vector<8x128xf32>, vector<128x32xf32>, vector<8x32xf32> -> vector<8x32xf32>
    %c0_86 = arith.constant 0 : index
    %c0_87 = arith.constant 0 : index
    %189 = vector.load %arg13[%c0_86, %c0_87] : memref<1x32xf32, #tpu.memory_space<vmem>>, vector<1x32xf32>
    %190 = vector.broadcast %189 : vector<1x32xf32> to vector<8x32xf32>
    %191 = arith.addf %188, %190 : vector<8x32xf32>
    %192 = arith.addf %118, %191 : vector<8x32xf32>
    %c0_88 = arith.constant 0 : index
    %c0_89 = arith.constant 0 : index
    %c0_90 = arith.constant 0 : index
    %193 = vector.load %arg14[%c0_88, %c0_89, %c0_90] : memref<1x8x32xf32, #tpu.memory_space<vmem>>, vector<1x8x32xf32>
    %194 = vector.shape_cast %193 : vector<1x8x32xf32> to vector<8x32xf32>
    %195 = vector.shape_cast %192 : vector<8x32xf32> to vector<1x8x32xf32>
    tpu.vector_store %arg14[%c0_88, %c0_89, %c0_90], %195 {strides = array<i32>} : memref<1x8x32xf32, #tpu.memory_space<vmem>>, vector<1x8x32xf32>,
    return
  }
  func.func @transform_0(%arg0: i32) -> (i32, i32, i32) {
    %c0_i32 = arith.constant 0 : i32
    %c0_i32_0 = arith.constant 0 : i32
    %c0_i32_1 = arith.constant 0 : i32
    return %arg0, %c0_i32, %c0_i32_0 : i32, i32, i32
  }
  func.func @transform_1(%arg0: i32) -> (i32, i32) {
    %c0_i32 = arith.constant 0 : i32
    %c0_i32_0 = arith.constant 0 : i32
    %c0_i32_1 = arith.constant 0 : i32
    return %c0_i32, %c0_i32_0 : i32, i32
  }
  func.func @transform_2(%arg0: i32) -> (i32, i32) {
    %c0_i32 = arith.constant 0 : i32
    %c0_i32_0 = arith.constant 0 : i32
    %c0_i32_1 = arith.constant 0 : i32
    return %c0_i32, %c0_i32_0 : i32, i32
  }
  func.func @transform_3(%arg0: i32) -> (i32, i32) {
    %c0_i32 = arith.constant 0 : i32
    %c0_i32_0 = arith.constant 0 : i32
    %c0_i32_1 = arith.constant 0 : i32
    return %c0_i32, %c0_i32_0 : i32, i32
  }
  func.func @transform_4(%arg0: i32) -> (i32, i32) {
    %c0_i32 = arith.constant 0 : i32
    %c0_i32_0 = arith.constant 0 : i32
    %c0_i32_1 = arith.constant 0 : i32
    return %c0_i32, %c0_i32_0 : i32, i32
  }
  func.func @transform_5(%arg0: i32) -> (i32, i32) {
    %c0_i32 = arith.constant 0 : i32
    %c0_i32_0 = arith.constant 0 : i32
    %c0_i32_1 = arith.constant 0 : i32
    return %c0_i32, %c0_i32_0 : i32, i32
  }
  func.func @transform_6(%arg0: i32) -> (i32, i32) {
    %c0_i32 = arith.constant 0 : i32
    %c0_i32_0 = arith.constant 0 : i32
    %c0_i32_1 = arith.constant 0 : i32
    return %c0_i32, %c0_i32_0 : i32, i32
  }
  func.func @transform_7(%arg0: i32) -> (i32, i32) {
    %c0_i32 = arith.constant 0 : i32
    %c0_i32_0 = arith.constant 0 : i32
    %c0_i32_1 = arith.constant 0 : i32
    return %c0_i32, %c0_i32_0 : i32, i32
  }
  func.func @transform_8(%arg0: i32) -> (i32, i32) {
    %c0_i32 = arith.constant 0 : i32
    %c0_i32_0 = arith.constant 0 : i32
    %c0_i32_1 = arith.constant 0 : i32
    return %c0_i32, %c0_i32_0 : i32, i32
  }
  func.func @transform_9(%arg0: i32) -> (i32, i32) {
    %c0_i32 = arith.constant 0 : i32
    %c0_i32_0 = arith.constant 0 : i32
    %c0_i32_1 = arith.constant 0 : i32
    return %c0_i32, %c0_i32_0 : i32, i32
  }
  func.func @transform_10(%arg0: i32) -> (i32, i32) {
    %c0_i32 = arith.constant 0 : i32
    %c0_i32_0 = arith.constant 0 : i32
    %c0_i32_1 = arith.constant 0 : i32
    return %c0_i32, %c0_i32_0 : i32, i32
  }
  func.func @transform_11(%arg0: i32) -> (i32, i32) {
    %c0_i32 = arith.constant 0 : i32
    %c0_i32_0 = arith.constant 0 : i32
    %c0_i32_1 = arith.constant 0 : i32
    return %c0_i32, %c0_i32_0 : i32, i32
  }
  func.func @transform_12(%arg0: i32) -> (i32, i32) {
    %c0_i32 = arith.constant 0 : i32
    %c0_i32_0 = arith.constant 0 : i32
    %c0_i32_1 = arith.constant 0 : i32
    return %c0_i32, %c0_i32_0 : i32, i32
  }
  func.func @transform_13(%arg0: i32) -> (i32, i32, i32) {
    %c0_i32 = arith.constant 0 : i32
    %c0_i32_0 = arith.constant 0 : i32
    %c0_i32_1 = arith.constant 0 : i32
    return %arg0, %c0_i32, %c0_i32_0 : i32, i32, i32
  }
  func.func @transform_14(%arg0: i32) -> (i32, i32, i32, i32) {
    %c0_i32 = arith.constant 0 : i32
    %c0_i32_0 = arith.constant 0 : i32
    %c0_i32_1 = arith.constant 0 : i32
    %c0_i32_2 = arith.constant 0 : i32
    return %arg0, %c0_i32, %c0_i32_0, %c0_i32_1 : i32, i32, i32, i32
  }
}

</mosaic_0001>

<llo_original>
// kernel: tpu_custom_call.1
$region0: #{tpu_custom_call.1}
  #allocation0 [shape = 'u32[]', space=smem, size = 0x4, offset = 0x4, fixed_abs, tag = 'smem constant byte address 0x4 - core index']
  #allocation1 [shape = 'u32[144,128]{1,0:T(1,128)}', space=vmem, size = 0x12000, scoped, tag = 'internal scratch']
  %s0 = inlined_call_operand.vmem [shape: f32[2,8,32], index: 0, kind: input, shape index: {}]
  %s1 = inlined_call_operand.vmem [shape: f32[1,32], index: 1, kind: input, shape index: {}]
  %s2 = inlined_call_operand.vmem [shape: f32[1,32], index: 2, kind: input, shape index: {}]
  %s3 = inlined_call_operand.vmem [shape: f32[32,96], index: 3, kind: input, shape index: {}]
  %s4 = inlined_call_operand.vmem [shape: f32[1,96], index: 4, kind: input, shape index: {}]
  %s5 = inlined_call_operand.vmem [shape: f32[32,32], index: 5, kind: input, shape index: {}]
  %s6 = inlined_call_operand.vmem [shape: f32[1,32], index: 6, kind: input, shape index: {}]
  %s7 = inlined_call_operand.vmem [shape: f32[1,32], index: 7, kind: input, shape index: {}]
  %s8 = inlined_call_operand.vmem [shape: f32[1,32], index: 8, kind: input, shape index: {}]
  %s9 = inlined_call_operand.vmem [shape: f32[32,128], index: 9, kind: input, shape index: {}]
  %s10 = inlined_call_operand.vmem [shape: f32[1,128], index: 10, kind: input, shape index: {}]
  %s11 = inlined_call_operand.vmem [shape: f32[128,32], index: 11, kind: input, shape index: {}]
  %s12 = inlined_call_operand.vmem [shape: f32[1,32], index: 12, kind: input, shape index: {}]
  %s13 = inlined_call_operand.hbm [shape: f32[2,8,32], index: 13, kind: output, shape index: {0}]
  %s14 = inlined_call_operand.hbm [shape: f32[2,4,8,8], index: 14, kind: output, shape index: {1}]
  %15 = xla_tuple %s13, %s14
  %s16 = sld [smem:[#allocation0]]
  $region93: #{tpu_custom_call.1} parent=0
    _
  %s18 = ssub.s32 1, %s16
  %s19 = scalar_select 0, %s18, %s16
  $region1: #{tpu_custom_call.1} parent=0
    #allocation2 [shape = 'u8[8192]{0}', space=vmem, size = 0x2000, scoped, tag = 'output window, operand 0']
    #allocation3 [shape = 's32[2]{0}', space=sflag, size = 0x8, scoped, tag = 'scoped memory for tpu_custom_call.1']
    #allocation4 [shape = 'u8[32768]{0}', space=vmem, size = 0x8000, scoped, tag = 'output window, operand 1']
    #allocation5 [shape = 's32[2]{0}', space=sflag, size = 0x8, scoped, tag = 'scoped memory for tpu_custom_call.1']
    %20 = vsyncpa [#allocation3], 0
    %s21 = scalar_lea.sflag [#allocation3], 1
    %22 = vsyncpa %s21, 0
    %23 = vsyncpa [#allocation5], 0
    %s24 = scalar_lea.sflag [#allocation5], 1
    %25 = vsyncpa %s24, 0
    loop: start=0, step=1, limit=4
    $region2: #{tpu_custom_call.1} parent=1 // loop_pre_header
      _
    $region3: #{tpu_custom_call.1} parent=1 // loop_header
      %s27 = sphi 0, %s31
      %p28 = scmp.ge.s32.totalorder %s27, 4
      %s37 = sphi 0, %s39
      %s40 = sphi 0, %s37
      %s41 = sphi 0, %s40
      %s57 = sphi 0, %s41
      %s61 = sphi 0, %s61
      %s63 = sphi 0, %s61
      %s64 = sphi 0, %s63
      %s78 = sphi 0, %s64
      %s82 = sphi 0, %s82
      %s84 = sphi 0, %s82
      %s85 = sphi 0, %s84
      %s99 = sphi 0, %s85
      %s103 = sphi 0, %s103
      %s105 = sphi 0, %s103
      %s106 = sphi 0, %s105
      %s120 = sphi 0, %s106
      %s124 = sphi 0, %s124
      %s126 = sphi 0, %s124
      %s127 = sphi 0, %s126
      %s141 = sphi 0, %s127
      %s145 = sphi 0, %s145
      %s147 = sphi 0, %s145
      %s148 = sphi 0, %s147
      %s162 = sphi 0, %s148
      %s166 = sphi 0, %s166
      %s168 = sphi 0, %s166
      %s169 = sphi 0, %s168
      %s183 = sphi 0, %s169
      %s187 = sphi 0, %s187
      %s189 = sphi 0, %s187
      %s190 = sphi 0, %s189
      %s204 = sphi 0, %s190
      %s208 = sphi 0, %s208
      %s210 = sphi 0, %s208
      %s211 = sphi 0, %s210
      %s225 = sphi 0, %s211
      %s229 = sphi 0, %s229
      %s231 = sphi 0, %s229
      %s232 = sphi 0, %s231
      %s246 = sphi 0, %s232
      %s250 = sphi 0, %s250
      %s252 = sphi 0, %s250
      %s253 = sphi 0, %s252
      %s267 = sphi 0, %s253
      %s271 = sphi 0, %s271
      %s273 = sphi 0, %s271
      %s274 = sphi 0, %s273
      %s288 = sphi 0, %s274
      %s292 = sphi 0, %s292
      %s294 = sphi 0, %s292
      %s295 = sphi 0, %s294
      %s309 = sphi 0, %s295
      %s315 = sphi 0, %s317
      %s318 = sphi 0, %s315
      %s319 = sphi 0, %s318
      %s335 = sphi 0, %s319
      %s341 = sphi 0, %s343
      %s344 = sphi 0, %s341
      %s345 = sphi 0, %s344
      %s361 = sphi 0, %s345
    $region4: #{tpu_custom_call.1} parent=1 // loop_header_branch
      %30 = sbr.rel (%p28) target = $region8
    $region5: #{tpu_custom_call.1} parent=1 // loop_body
      %s32 = ssub.s32 %s27, 1
      %s33 = ssub.s32 %s27, 2
      %s34 = sadd.s32 %s27, 1
      %s35 = ssub.s32 %s27, %s34
      %p36 = scmp.eq.s32.totalorder %s35, 0
      %s38 = sadd.s32 %s37, 1
      %s39 = scalar_select %p36, %s37, %s38
      %p42 = pneg %p36
      %p43 = scmp.eq.s32.totalorder %s27, 1
      %p44 = por %p42, %p43
      %p45 = scmp.ne.s32.totalorder %s37, %s40
      %p46 = scmp.eq.s32.totalorder %s27, 0
      %p47 = por %p45, %p46
      %p48 = scmp.ne.s32.totalorder %s37, %s40
      %p49 = scmp.eq.s32.totalorder %s32, 1
      %p50 = por %p48, %p49
      %p51 = scmp.ne.s32.totalorder %s40, %s41
      %p52 = scmp.eq.s32.totalorder %s32, 0
      %p53 = por %p51, %p52
      %p54 = scmp.ne.s32.totalorder %s40, %s41
      %p55 = scmp.eq.s32.totalorder %s33, 1
      %p56 = por %p54, %p55
      %p58 = scmp.ne.s32.totalorder %s41, %s57
      %p59 = scmp.eq.s32.totalorder %s33, 0
      %p60 = por %p58, %p59
      %s62 = sadd.s32 %s61, 1
      %p65 = scmp.eq.s32.totalorder %s27, 1
      %p66 = scmp.ne.s32.totalorder %s61, %s63
      %p67 = scmp.eq.s32.totalorder %s27, 0
      %p68 = por %p66, %p67
      %p69 = scmp.ne.s32.totalorder %s61, %s63
      %p70 = scmp.eq.s32.totalorder %s32, 1
      %p71 = por %p69, %p70
      %p72 = scmp.ne.s32.totalorder %s63, %s64
      %p73 = scmp.eq.s32.totalorder %s32, 0
      %p74 = por %p72, %p73
      %p75 = scmp.ne.s32.totalorder %s63, %s64
      %p76 = scmp.eq.s32.totalorder %s33, 1
      %p77 = por %p75, %p76
      %p79 = scmp.ne.s32.totalorder %s64, %s78
      %p80 = scmp.eq.s32.totalorder %s33, 0
      %p81 = por %p79, %p80
      %s83 = sadd.s32 %s82, 1
      %p86 = scmp.eq.s32.totalorder %s27, 1
      %p87 = scmp.ne.s32.totalorder %s82, %s84
      %p88 = scmp.eq.s32.totalorder %s27, 0
      %p89 = por %p87, %p88
      %p90 = scmp.ne.s32.totalorder %s82, %s84
      %p91 = scmp.eq.s32.totalorder %s32, 1
      %p92 = por %p90, %p91
      %p93 = scmp.ne.s32.totalorder %s84, %s85
      %p94 = scmp.eq.s32.totalorder %s32, 0
      %p95 = por %p93, %p94
      %p96 = scmp.ne.s32.totalorder %s84, %s85
      %p97 = scmp.eq.s32.totalorder %s33, 1
      %p98 = por %p96, %p97
      %p100 = scmp.ne.s32.totalorder %s85, %s99
      %p101 = scmp.eq.s32.totalorder %s33, 0
      %p102 = por %p100, %p101
      %s104 = sadd.s32 %s103, 1
      %p107 = scmp.eq.s32.totalorder %s27, 1
      %p108 = scmp.ne.s32.totalorder %s103, %s105
      %p109 = scmp.eq.s32.totalorder %s27, 0
      %p110 = por %p108, %p109
      %p111 = scmp.ne.s32.totalorder %s103, %s105
      %p112 = scmp.eq.s32.totalorder %s32, 1
      %p113 = por %p111, %p112
      %p114 = scmp.ne.s32.totalorder %s105, %s106
      %p115 = scmp.eq.s32.totalorder %s32, 0
      %p116 = por %p114, %p115
      %p117 = scmp.ne.s32.totalorder %s105, %s106
      %p118 = scmp.eq.s32.totalorder %s33, 1
      %p119 = por %p117, %p118
      %p121 = scmp.ne.s32.totalorder %s106, %s120
      %p122 = scmp.eq.s32.totalorder %s33, 0
      %p123 = por %p121, %p122
      %s125 = sadd.s32 %s124, 1
      %p128 = scmp.eq.s32.totalorder %s27, 1
      %p129 = scmp.ne.s32.totalorder %s124, %s126
      %p130 = scmp.eq.s32.totalorder %s27, 0
      %p131 = por %p129, %p130
      %p132 = scmp.ne.s32.totalorder %s124, %s126
      %p133 = scmp.eq.s32.totalorder %s32, 1
      %p134 = por %p132, %p133
      %p135 = scmp.ne.s32.totalorder %s126, %s127
      %p136 = scmp.eq.s32.totalorder %s32, 0
      %p137 = por %p135, %p136
      %p138 = scmp.ne.s32.totalorder %s126, %s127
      %p139 = scmp.eq.s32.totalorder %s33, 1
      %p140 = por %p138, %p139
      %p142 = scmp.ne.s32.totalorder %s127, %s141
      %p143 = scmp.eq.s32.totalorder %s33, 0
      %p144 = por %p142, %p143
      %s146 = sadd.s32 %s145, 1
      %p149 = scmp.eq.s32.totalorder %s27, 1
      %p150 = scmp.ne.s32.totalorder %s145, %s147
      %p151 = scmp.eq.s32.totalorder %s27, 0
      %p152 = por %p150, %p151
      %p153 = scmp.ne.s32.totalorder %s145, %s147
      %p154 = scmp.eq.s32.totalorder %s32, 1
      %p155 = por %p153, %p154
      %p156 = scmp.ne.s32.totalorder %s147, %s148
      %p157 = scmp.eq.s32.totalorder %s32, 0
      %p158 = por %p156, %p157
      %p159 = scmp.ne.s32.totalorder %s147, %s148
      %p160 = scmp.eq.s32.totalorder %s33, 1
      %p161 = por %p159, %p160
      %p163 = scmp.ne.s32.totalorder %s148, %s162
      %p164 = scmp.eq.s32.totalorder %s33, 0
      %p165 = por %p163, %p164
      %s167 = sadd.s32 %s166, 1
      %p170 = scmp.eq.s32.totalorder %s27, 1
      %p171 = scmp.ne.s32.totalorder %s166, %s168
      %p172 = scmp.eq.s32.totalorder %s27, 0
      %p173 = por %p171, %p172
      %p174 = scmp.ne.s32.totalorder %s166, %s168
      %p175 = scmp.eq.s32.totalorder %s32, 1
      %p176 = por %p174, %p175
      %p177 = scmp.ne.s32.totalorder %s168, %s169
      %p178 = scmp.eq.s32.totalorder %s32, 0
      %p179 = por %p177, %p178
      %p180 = scmp.ne.s32.totalorder %s168, %s169
      %p181 = scmp.eq.s32.totalorder %s33, 1
      %p182 = por %p180, %p181
      %p184 = scmp.ne.s32.totalorder %s169, %s183
      %p185 = scmp.eq.s32.totalorder %s33, 0
      %p186 = por %p184, %p185
      %s188 = sadd.s32 %s187, 1
      %p191 = scmp.eq.s32.totalorder %s27, 1
      %p192 = scmp.ne.s32.totalorder %s187, %s189
      %p193 = scmp.eq.s32.totalorder %s27, 0
      %p194 = por %p192, %p193
      %p195 = scmp.ne.s32.totalorder %s187, %s189
      %p196 = scmp.eq.s32.totalorder %s32, 1
      %p197 = por %p195, %p196
      %p198 = scmp.ne.s32.totalorder %s189, %s190
      %p199 = scmp.eq.s32.totalorder %s32, 0
      %p200 = por %p198, %p199
      %p201 = scmp.ne.s32.totalorder %s189, %s190
      %p202 = scmp.eq.s32.totalorder %s33, 1
      %p203 = por %p201, %p202
      %p205 = scmp.ne.s32.totalorder %s190, %s204
      %p206 = scmp.eq.s32.totalorder %s33, 0
      %p207 = por %p205, %p206
      %s209 = sadd.s32 %s208, 1
      %p212 = scmp.eq.s32.totalorder %s27, 1
      %p213 = scmp.ne.s32.totalorder %s208, %s210
      %p214 = scmp.eq.s32.totalorder %s27, 0
      %p215 = por %p213, %p214
      %p216 = scmp.ne.s32.totalorder %s208, %s210
      %p217 = scmp.eq.s32.totalorder %s32, 1
      %p218 = por %p216, %p217
      %p219 = scmp.ne.s32.totalorder %s210, %s211
      %p220 = scmp.eq.s32.totalorder %s32, 0
      %p221 = por %p219, %p220
      %p222 = scmp.ne.s32.totalorder %s210, %s211
      %p223 = scmp.eq.s32.totalorder %s33, 1
      %p224 = por %p222, %p223
      %p226 = scmp.ne.s32.totalorder %s211, %s225
      %p227 = scmp.eq.s32.totalorder %s33, 0
      %p228 = por %p226, %p227
      %s230 = sadd.s32 %s229, 1
      %p233 = scmp.eq.s32.totalorder %s27, 1
      %p234 = scmp.ne.s32.totalorder %s229, %s231
      %p235 = scmp.eq.s32.totalorder %s27, 0
      %p236 = por %p234, %p235
      %p237 = scmp.ne.s32.totalorder %s229, %s231
      %p238 = scmp.eq.s32.totalorder %s32, 1
      %p239 = por %p237, %p238
      %p240 = scmp.ne.s32.totalorder %s231, %s232
      %p241 = scmp.eq.s32.totalorder %s32, 0
      %p242 = por %p240, %p241
      %p243 = scmp.ne.s32.totalorder %s231, %s232
      %p244 = scmp.eq.s32.totalorder %s33, 1
      %p245 = por %p243, %p244
      %p247 = scmp.ne.s32.totalorder %s232, %s246
      %p248 = scmp.eq.s32.totalorder %s33, 0
      %p249 = por %p247, %p248
      %s251 = sadd.s32 %s250, 1
      %p254 = scmp.eq.s32.totalorder %s27, 1
      %p255 = scmp.ne.s32.totalorder %s250, %s252
      %p256 = scmp.eq.s32.totalorder %s27, 0
      %p257 = por %p255, %p256
      %p258 = scmp.ne.s32.totalorder %s250, %s252
      %p259 = scmp.eq.s32.totalorder %s32, 1
      %p260 = por %p258, %p259
      %p261 = scmp.ne.s32.totalorder %s252, %s253
      %p262 = scmp.eq.s32.totalorder %s32, 0
      %p263 = por %p261, %p262
      %p264 = scmp.ne.s32.totalorder %s252, %s253
      %p265 = scmp.eq.s32.totalorder %s33, 1
      %p266 = por %p264, %p265
      %p268 = scmp.ne.s32.totalorder %s253, %s267
      %p269 = scmp.eq.s32.totalorder %s33, 0
      %p270 = por %p268, %p269
      %s272 = sadd.s32 %s271, 1
      %p275 = scmp.eq.s32.totalorder %s27, 1
      %p276 = scmp.ne.s32.totalorder %s271, %s273
      %p277 = scmp.eq.s32.totalorder %s27, 0
      %p278 = por %p276, %p277
      %p279 = scmp.ne.s32.totalorder %s271, %s273
      %p280 = scmp.eq.s32.totalorder %s32, 1
      %p281 = por %p279, %p280
      %p282 = scmp.ne.s32.totalorder %s273, %s274
      %p283 = scmp.eq.s32.totalorder %s32, 0
      %p284 = por %p282, %p283
      %p285 = scmp.ne.s32.totalorder %s273, %s274
      %p286 = scmp.eq.s32.totalorder %s33, 1
      %p287 = por %p285, %p286
      %p289 = scmp.ne.s32.totalorder %s274, %s288
      %p290 = scmp.eq.s32.totalorder %s33, 0
      %p291 = por %p289, %p290
      %s293 = sadd.s32 %s292, 1
      %p296 = scmp.eq.s32.totalorder %s27, 1
      %p297 = scmp.ne.s32.totalorder %s292, %s294
      %p298 = scmp.eq.s32.totalorder %s27, 0
      %p299 = por %p297, %p298
      %p300 = scmp.ne.s32.totalorder %s292, %s294
      %p301 = scmp.eq.s32.totalorder %s32, 1
      %p302 = por %p300, %p301
      %p303 = scmp.ne.s32.totalorder %s294, %s295
      %p304 = scmp.eq.s32.totalorder %s32, 0
      %p305 = por %p303, %p304
      %p306 = scmp.ne.s32.totalorder %s294, %s295
      %p307 = scmp.eq.s32.totalorder %s33, 1
      %p308 = por %p306, %p307
      %p310 = scmp.ne.s32.totalorder %s295, %s309
      %p311 = scmp.eq.s32.totalorder %s33, 0
      %p312 = por %p310, %p311
      %s313 = ssub.s32 %s27, %s34
      %p314 = scmp.eq.s32.totalorder %s313, 0
      %s316 = sadd.s32 %s315, 1
      %s317 = scalar_select %p314, %s315, %s316
      %p320 = pneg %p314
      %p321 = scmp.eq.s32.totalorder %s27, 1
      %p322 = por %p320, %p321
      %p323 = scmp.ne.s32.totalorder %s315, %s318
      %p324 = scmp.eq.s32.totalorder %s27, 0
      %p325 = por %p323, %p324
      %p326 = scmp.ne.s32.totalorder %s315, %s318
      %p327 = scmp.eq.s32.totalorder %s32, 1
      %p328 = por %p326, %p327
      %p329 = scmp.ne.s32.totalorder %s318, %s319
      %p330 = scmp.eq.s32.totalorder %s32, 0
      %p331 = por %p329, %p330
      %p332 = scmp.ne.s32.totalorder %s318, %s319
      %p333 = scmp.eq.s32.totalorder %s33, 1
      %p334 = por %p332, %p333
      %p336 = scmp.ne.s32.totalorder %s319, %s335
      %p337 = scmp.eq.s32.totalorder %s33, 0
      %p338 = por %p336, %p337
      %s339 = ssub.s32 %s27, %s34
      %p340 = scmp.eq.s32.totalorder %s339, 0
      %s342 = sadd.s32 %s341, 1
      %s343 = scalar_select %p340, %s341, %s342
      %p346 = pneg %p340
      %p347 = scmp.eq.s32.totalorder %s27, 1
      %p348 = por %p346, %p347
      %p349 = scmp.ne.s32.totalorder %s341, %s344
      %p350 = scmp.eq.s32.totalorder %s27, 0
      %p351 = por %p349, %p350
      %p352 = scmp.ne.s32.totalorder %s341, %s344
      %p353 = scmp.eq.s32.totalorder %s32, 1
      %p354 = por %p352, %p353
      %p355 = scmp.ne.s32.totalorder %s344, %s345
      %p356 = scmp.eq.s32.totalorder %s32, 0
      %p357 = por %p355, %p356
      %p358 = scmp.ne.s32.totalorder %s344, %s345
      %p359 = scmp.eq.s32.totalorder %s33, 1
      %p360 = por %p358, %p359
      %p362 = scmp.ne.s32.totalorder %s345, %s361
      %p363 = scmp.eq.s32.totalorder %s33, 0
      %p364 = por %p362, %p363
      %p365 = scmp.le.s32.totalorder 1, %s27
      %p366 = scmp.lt.s32.totalorder %s27, 3
      %p367 = pnand %p365, %p366
      %p368 = pneg %p367
      // Predicated region
      $region9: #{tpu_custom_call.1} parent=5 // pred_check
        _
      $region10: #{tpu_custom_call.1} parent=5 // pred_check_branch
        %370 = sbr.rel (%p367) target = $region12
      $region11: #{tpu_custom_call.1} parent=5 // pred_region
        %s371 = ssub.s32 %s27, 1
        // Predicated region
        $region13: #{tpu_custom_call.1} parent=11 // pred_check
          %p372 = pneg %p74
        $region14: #{tpu_custom_call.1} parent=11 // pred_check_branch
          %374 = sbr.rel (%p372) target = $region16
        $region15: #{tpu_custom_call.1} parent=11 // pred_region
          _
        $region16: #{tpu_custom_call.1} parent=11 // pred_fallthru
          _
        // Predicated region
        $region17: #{tpu_custom_call.1} parent=11 // pred_check
          %p375 = pneg %p95
        $region18: #{tpu_custom_call.1} parent=11 // pred_check_branch
          %377 = sbr.rel (%p375) target = $region20
        $region19: #{tpu_custom_call.1} parent=11 // pred_region
          _
        $region20: #{tpu_custom_call.1} parent=11 // pred_fallthru
          _
        // Predicated region
        $region21: #{tpu_custom_call.1} parent=11 // pred_check
          %p378 = pneg %p116
        $region22: #{tpu_custom_call.1} parent=11 // pred_check_branch
          %380 = sbr.rel (%p378) target = $region24
        $region23: #{tpu_custom_call.1} parent=11 // pred_region
          _
        $region24: #{tpu_custom_call.1} parent=11 // pred_fallthru
          _
        // Predicated region
        $region25: #{tpu_custom_call.1} parent=11 // pred_check
          %p381 = pneg %p137
        $region26: #{tpu_custom_call.1} parent=11 // pred_check_branch
          %383 = sbr.rel (%p381) target = $region28
        $region27: #{tpu_custom_call.1} parent=11 // pred_region
          _
        $region28: #{tpu_custom_call.1} parent=11 // pred_fallthru
          _
        // Predicated region
        $region29: #{tpu_custom_call.1} parent=11 // pred_check
          %p384 = pneg %p158
        $region30: #{tpu_custom_call.1} parent=11 // pred_check_branch
          %386 = sbr.rel (%p384) target = $region32
        $region31: #{tpu_custom_call.1} parent=11 // pred_region
          _
        $region32: #{tpu_custom_call.1} parent=11 // pred_fallthru
          _
        // Predicated region
        $region33: #{tpu_custom_call.1} parent=11 // pred_check
          %p387 = pneg %p179
        $region34: #{tpu_custom_call.1} parent=11 // pred_check_branch
          %389 = sbr.rel (%p387) target = $region36
        $region35: #{tpu_custom_call.1} parent=11 // pred_region
          _
        $region36: #{tpu_custom_call.1} parent=11 // pred_fallthru
          _
        // Predicated region
        $region37: #{tpu_custom_call.1} parent=11 // pred_check
          %p390 = pneg %p200
        $region38: #{tpu_custom_call.1} parent=11 // pred_check_branch
          %392 = sbr.rel (%p390) target = $region40
        $region39: #{tpu_custom_call.1} parent=11 // pred_region
          _
        $region40: #{tpu_custom_call.1} parent=11 // pred_fallthru
          _
        // Predicated region
        $region41: #{tpu_custom_call.1} parent=11 // pred_check
          %p393 = pneg %p221
        $region42: #{tpu_custom_call.1} parent=11 // pred_check_branch
          %395 = sbr.rel (%p393) target = $region44
        $region43: #{tpu_custom_call.1} parent=11 // pred_region
          _
        $region44: #{tpu_custom_call.1} parent=11 // pred_fallthru
          _
        // Predicated region
        $region45: #{tpu_custom_call.1} parent=11 // pred_check
          %p396 = pneg %p242
        $region46: #{tpu_custom_call.1} parent=11 // pred_check_branch
          %398 = sbr.rel (%p396) target = $region48
        $region47: #{tpu_custom_call.1} parent=11 // pred_region
          _
        $region48: #{tpu_custom_call.1} parent=11 // pred_fallthru
          _
        // Predicated region
        $region49: #{tpu_custom_call.1} parent=11 // pred_check
          %p399 = pneg %p263
        $region50: #{tpu_custom_call.1} parent=11 // pred_check_branch
          %401 = sbr.rel (%p399) target = $region52
        $region51: #{tpu_custom_call.1} parent=11 // pred_region
          _
        $region52: #{tpu_custom_call.1} parent=11 // pred_fallthru
          _
        // Predicated region
        $region53: #{tpu_custom_call.1} parent=11 // pred_check
          %p402 = pneg %p284
        $region54: #{tpu_custom_call.1} parent=11 // pred_check_branch
          %404 = sbr.rel (%p402) target = $region56
        $region55: #{tpu_custom_call.1} parent=11 // pred_region
          _
        $region56: #{tpu_custom_call.1} parent=11 // pred_fallthru
          _
        // Predicated region
        $region57: #{tpu_custom_call.1} parent=11 // pred_check
          %p405 = pneg %p305
        $region58: #{tpu_custom_call.1} parent=11 // pred_check_branch
          %407 = sbr.rel (%p405) target = $region60
        $region59: #{tpu_custom_call.1} parent=11 // pred_region
          _
        $region60: #{tpu_custom_call.1} parent=11 // pred_fallthru
          _
      $region12: #{tpu_custom_call.1} parent=5 // pred_fallthru
        _
      %p408 = scmp.lt.s32.totalorder %s27, 2
      // Predicated region
      $region61: #{tpu_custom_call.1} parent=5 // pred_check
        %p409 = pneg %p408
      $region62: #{tpu_custom_call.1} parent=5 // pred_check_branch
        %411 = sbr.rel (%p409) target = $region64
      $region63: #{tpu_custom_call.1} parent=5 // pred_region
        // Predicated region
        $region65: #{tpu_custom_call.1} parent=63 // pred_check
          %p412 = pneg %p47
        $region66: #{tpu_custom_call.1} parent=63 // pred_check_branch
          %414 = sbr.rel (%p412) target = $region68
        $region67: #{tpu_custom_call.1} parent=63 // pred_region
          %p415 = scmp.lt.s32.totalorder %s27, 1
          %s416 = scalar_select %p415, %s27, 1
          %s417 = smul.addr %s416, 8
          %s418 = scalar_lea.vmem %s0, %s417
        $region68: #{tpu_custom_call.1} parent=63 // pred_fallthru
          _
      $region64: #{tpu_custom_call.1} parent=5 // pred_fallthru
        _
      %p419 = scmp.le.s32.totalorder 1, %s27
      %p420 = scmp.lt.s32.totalorder %s27, 3
      %p421 = pnand %p419, %p420
      %p422 = pneg %p421
      // Predicated region
      $region69: #{tpu_custom_call.1} parent=5 // pred_check
        _
      $region70: #{tpu_custom_call.1} parent=5 // pred_check_branch
        %424 = sbr.rel (%p421) target = $region72
      $region71: #{tpu_custom_call.1} parent=5 // pred_region
        %s425 = ssub.s32 %s27, 1
        %p426 = scmp.lt.s32.totalorder %s32, 1
        %s427 = scalar_select %p426, %s32, 1
        %s428 = smul.addr %s427, 8
        %s429 = scalar_lea.vmem %s0, %s428
        %p430 = pneg %p53
        %p431 = pneg %p50
        %p432 = pneg %p74
        %p433 = pneg %p71
        %p434 = pneg %p95
        %p435 = pneg %p92
        %p436 = pneg %p116
        %p437 = pneg %p113
        %p438 = pneg %p137
        %p439 = pneg %p134
        %p440 = pneg %p158
        %p441 = pneg %p155
        %p442 = pneg %p179
        %p443 = pneg %p176
        %p444 = pneg %p200
        %p445 = pneg %p197
        %p446 = pneg %p221
        %p447 = pneg %p218
        %p448 = pneg %p242
        %p449 = pneg %p239
        %p450 = pneg %p263
        %p451 = pneg %p260
        %p452 = pneg %p284
        %p453 = pneg %p281
        %p454 = pneg %p305
        %p455 = pneg %p302
        %p456 = pneg %p331
        %p457 = pneg %p328
        %s458 = sand.u32 %s318, 1
        %s459 = scalar_lea.sflag [#allocation3], %s458
        %s460 = sand.u32 %s318, 1
        %s461 = smul.addr %s460, 8
        %s462 = scalar_lea.vmem [#allocation2], %s461
        %p463 = pneg %p357
        %p464 = pneg %p354
        %s465 = sand.u32 %s344, 1
        %s466 = scalar_lea.sflag [#allocation5], %s465
        %s467 = sand.u32 %s344, 1
        %s468 = smul.addr %s467, 32
        %s469 = scalar_lea.vmem [#allocation4], %s468
        %p470 = scmp.lt.s32.totalorder %s32, 1
        %s471 = scalar_select %p470, %s32, 1
        %s472 = smul.addr %s471, 8
        %s473 = scalar_lea.vmem %s0, %s472
        %v474 = vld [vmem:[%s473] sm:$0xff]
        %vm475 = vcmask 261120
        %v476 = vsel %vm475, %v474, 0.0
        %477 = vadd.xlane.f32.xlu0 %v476
        %v478 = vpop.xlane.xlu0 %477
        %v479 = vrcp.pop 32.0
        %v480 = vmul.f32 %v478, %v479
        %v481 = vsub.f32 %v474, %v480
        %v482 = vmul.f32 %v481, %v481
        %v483 = vsel %vm475, %v482, 0.0
        %484 = vadd.xlane.f32.xlu0 %v483
        %v485 = vpop.xlane.xlu0 %484
        %v486 = vmul.f32 %v485, %v479
        %v487 = vadd.f32 %v486, 1e-05
        %v488 = vrsqrt.pop %v487
        %v489 = vmul.f32 %v481, %v488
        %v490 = vld [vmem:[%s1] sm:$0x1]
        %v492 = vlaneseq
        %v493 = vshrl.u32 %v492, 7
        %v494 = vsub.s32 0, %v493
        %v495 = vrot.slane %v490, %v494
        %v497 = vmul.f32 %v489, %v495
        %v498 = vld [vmem:[%s2] sm:$0x1]
        %v500 = vlaneseq
        %v501 = vshrl.u32 %v500, 7
        %v502 = vsub.s32 0, %v501
        %v503 = vrot.slane %v498, %v502
        %v505 = vadd.f32 %v497, %v503
        %v506 = vld [vmem:[%s3] sm:$0xff]
        %v507 = vld [vmem:[%s3 + $0x8] sm:$0xff]
        %v508 = vld [vmem:[%s3 + $0x10] sm:$0xff]
        %v509 = vld [vmem:[%s3 + $0x18] sm:$0xff]
        %v510 = vld [vmem:[%s4] sm:$0x1]
        %v512 = vlaneseq
        %v513 = vshrl.u32 %v512, 7
        %v514 = vsub.s32 0, %v513
        %v515 = vrot.slane %v510, %v514
        %v518 = vsel %vm475, %v505, 0
        %520 = vmatprep.subr.mxu0 0.0
        %521 = vmatpush1.msra.mxu0 %v506
        %522 = vmatprep.subr.mxu0 0.0
        %523 = vmatpush1.msra.mxu0 %v507
        %524 = vmatprep.subr.mxu0 0.0
        %525 = vmatpush1.msra.mxu0 %v508
        %526 = vmatprep.subr.mxu0 0.0
        %527 = vmatpush1.msra.mxu0 %v509
        %528 = vmatprep.subr.mxu0 0.0
        %529 = vmatpush1.msra.mxu0 0.0
        %530 = vmatprep.subr.mxu0 0.0
        %531 = vmatpush1.msra.mxu0 0.0
        %532 = vmatprep.subr.mxu0 0.0
        %533 = vmatpush1.msra.mxu0 0.0
        %534 = vmatprep.subr.mxu0 0.0
        %535 = vmatpush1.msra.mxu0 0.0
        %536 = vmatprep.subr.mxu0 0.0
        %537 = vmatpush1.msra.mxu0 0.0
        %538 = vmatprep.subr.mxu0 0.0
        %539 = vmatpush1.msra.mxu0 0.0
        %540 = vmatprep.subr.mxu0 0.0
        %541 = vmatpush1.msra.mxu0 0.0
        %542 = vmatprep.subr.mxu0 0.0
        %543 = vmatpush1.msra.mxu0 0.0
        %544 = vmatprep.subr.mxu0 0.0
        %545 = vmatpush1.msra.mxu0 0.0
        %546 = vmatprep.subr.mxu0 0.0
        %547 = vmatpush1.msra.mxu0 0.0
        %548 = vmatprep.subr.mxu0 0.0
        %549 = vmatpush1.msra.mxu0 0.0
        %550 = vmatprep.subr.mxu0 0.0
        %551 = vmatpush1.msra.mxu0 0.0
        %552 = vmatprep.subr.mxu0 0.0
        %553 = vmatpush1.msra.mxu0 0.0
        %554 = vmatprep.subr.mxu0 0.0
        %555 = vmatpush1.msra.mxu0 0.0
        %556 = vmatprep.subr.mxu0 0.0
        %557 = vmatpush1.msra.mxu0 0.0
        %558 = vmatprep.subr.mxu0 0.0
        %559 = vmatpush1.msra.mxu0 0.0
        %560 = vmatprep.subr.mxu0 0.0
        %561 = vmatpush1.msra.mxu0 0.0
        %562 = vmatprep.subr.mxu0 0.0
        %563 = vmatpush1.msra.mxu0 0.0
        %564 = vmatprep.subr.mxu0 0.0
        %565 = vmatpush1.msra.mxu0 0.0
        %566 = vmatprep.subr.mxu0 0.0
        %567 = vmatpush1.msra.mxu0 0.0
        %568 = vmatprep.subr.mxu0 0.0
        %569 = vmatpush1.msra.mxu0 0.0
        %570 = vmatprep.subr.mxu0 0.0
        %571 = vmatpush1.msra.mxu0 0.0
        %572 = vmatprep.subr.mxu0 0.0
        %573 = vmatpush1.msra.mxu0 0.0
        %574 = vmatprep.subr.mxu0 0.0
        %575 = vmatpush1.msra.mxu0 0.0
        %576 = vmatprep.subr.mxu0 0.0
        %577 = vmatpush1.msra.mxu0 0.0
        %578 = vmatprep.subr.mxu0 0.0
        %579 = vmatpush1.msra.mxu0 0.0
        %580 = vmatprep.subr.mxu0 0.0
        %581 = vmatpush1.msra.mxu0 0.0
        %582 = vmatprep.subr.mxu0 0.0
        %583 = vmatpush1.msra.mxu0 0.0
        %584 = vmatprep.mubr.f32.mxu0 0.0
        %585 = vmatmul.mubr.f32.gmra.mrb[0].mxu0 %v518
        %v586 = vpop.f32.mrb[0].mxu0
        %v587 = vadd.f32 %v515, %v586
        %v588 = vpop.f32.mrb[0].mxu0
        %589 = vdwg.mxu0
        %591 = vrot.lane.b32.xlu0 %v587, 96
        %v592 = vpop.permute.xlu0 %591
        %vm593 = vcmask 64512
        %v594 = vsel %vm593, %v587, 0
        %v596 = vsel %vm593, %v592, 0
        %598 = vmatprep.subr.mxu0 0.0
        %599 = vmatpush1.xpose.msra.mxu0 %v596
        %600 = vmatprep.subr.mxu0 0.0
        %601 = vmatpush1.xpose.msra.mxu0 0.0
        %602 = vmatprep.subr.mxu0 0.0
        %603 = vmatpush1.xpose.msra.mxu0 0.0
        %604 = vmatprep.subr.mxu0 0.0
        %605 = vmatpush1.xpose.msra.mxu0 0.0
        %606 = vmatprep.subr.mxu0 0.0
        %607 = vmatpush1.xpose.msra.mxu0 0.0
        %608 = vmatprep.subr.mxu0 0.0
        %609 = vmatpush1.xpose.msra.mxu0 0.0
        %610 = vmatprep.subr.mxu0 0.0
        %611 = vmatpush1.xpose.msra.mxu0 0.0
        %612 = vmatprep.subr.mxu0 0.0
        %613 = vmatpush1.xpose.msra.mxu0 0.0
        %614 = vmatprep.subr.mxu0 0.0
        %615 = vmatpush1.xpose.msra.mxu0 0.0
        %616 = vmatprep.subr.mxu0 0.0
        %617 = vmatpush1.xpose.msra.mxu0 0.0
        %618 = vmatprep.subr.mxu0 0.0
        %619 = vmatpush1.xpose.msra.mxu0 0.0
        %620 = vmatprep.subr.mxu0 0.0
        %621 = vmatpush1.xpose.msra.mxu0 0.0
        %622 = vmatprep.subr.mxu0 0.0
        %623 = vmatpush1.xpose.msra.mxu0 0.0
        %624 = vmatprep.subr.mxu0 0.0
        %625 = vmatpush1.xpose.msra.mxu0 0.0
        %626 = vmatprep.subr.mxu0 0.0
        %627 = vmatpush1.xpose.msra.mxu0 0.0
        %628 = vmatprep.subr.mxu0 0.0
        %629 = vmatpush1.xpose.msra.mxu0 0.0
        %630 = vmatprep.subr.mxu0 0.0
        %631 = vmatpush1.xpose.msra.mxu0 0.0
        %632 = vmatprep.subr.mxu0 0.0
        %633 = vmatpush1.xpose.msra.mxu0 0.0
        %634 = vmatprep.subr.mxu0 0.0
        %635 = vmatpush1.xpose.msra.mxu0 0.0
        %636 = vmatprep.subr.mxu0 0.0
        %637 = vmatpush1.xpose.msra.mxu0 0.0
        %638 = vmatprep.subr.mxu0 0.0
        %639 = vmatpush1.xpose.msra.mxu0 0.0
        %640 = vmatprep.subr.mxu0 0.0
        %641 = vmatpush1.xpose.msra.mxu0 0.0
        %642 = vmatprep.subr.mxu0 0.0
        %643 = vmatpush1.xpose.msra.mxu0 0.0
        %644 = vmatprep.subr.mxu0 0.0
        %645 = vmatpush1.xpose.msra.mxu0 0.0
        %646 = vmatprep.subr.mxu0 0.0
        %647 = vmatpush1.xpose.msra.mxu0 0.0
        %648 = vmatprep.subr.mxu0 0.0
        %649 = vmatpush1.xpose.msra.mxu0 0.0
        %650 = vmatprep.subr.mxu0 0.0
        %651 = vmatpush1.xpose.msra.mxu0 0.0
        %652 = vmatprep.subr.mxu0 0.0
        %653 = vmatpush1.xpose.msra.mxu0 0.0
        %654 = vmatprep.subr.mxu0 0.0
        %655 = vmatpush1.xpose.msra.mxu0 0.0
        %656 = vmatprep.subr.mxu0 0.0
        %657 = vmatpush1.xpose.msra.mxu0 0.0
        %658 = vmatprep.subr.mxu0 0.0
        %659 = vmatpush1.xpose.msra.mxu0 0.0
        %660 = vmatprep.subr.mxu0 0.0
        %661 = vmatpush1.xpose.msra.mxu0 0.0
        %662 = vmatprep.mubr.f32.mxu0 0.0
        %663 = vmatmul.mubr.f32.gmra.mrb[0].mxu0 %v594
        %v664 = vpop.f32.mrb[0].mxu0
        %v665 = vadd.f32 0.0, %v664
        %v666 = vpop.f32.mrb[0].mxu0
        %667 = vdwg.mxu0
        %v668 = vmul.f32 %v665, 0.35355338
        %v669 = vsel %vm593, %v668, -inf
        %670 = vmax.xlane.f32.xlu0 %v669
        %v671 = vpop.xlane.xlu0 %670
        %v672 = vsub.f32 %v668, %v671
        %v673 = vmul.f32 %v672, 1.442695
        %v674 = vpow.pop %v673
        %v675 = vsel %vm593, %v674, 0.0
        %676 = vadd.xlane.f32.xlu0 %v675
        %v677 = vpop.xlane.xlu0 %676
        %v678 = vrcp.pop %v677
        %v679 = vmul.f32 %v674, %v678
        %680 = vst.msk [vmem:[%s469] sm:$0xff] %vm593, %v679
        %681 = vrot.lane.b32.xlu0 %v587, 64
        %v682 = vpop.permute.xlu0 %681
        %v685 = vsel %vm593, %v679, 0
        %687 = vmatprep.subr.mxu0 0.0
        %688 = vmatpush1.msra.mxu0 %v682
        %689 = vmatprep.subr.mxu0 0.0
        %690 = vmatpush1.msra.mxu0 0.0
        %691 = vmatprep.subr.mxu0 0.0
        %692 = vmatpush1.msra.mxu0 0.0
        %693 = vmatprep.subr.mxu0 0.0
        %694 = vmatpush1.msra.mxu0 0.0
        %695 = vmatprep.subr.mxu0 0.0
        %696 = vmatpush1.msra.mxu0 0.0
        %697 = vmatprep.subr.mxu0 0.0
        %698 = vmatpush1.msra.mxu0 0.0
        %699 = vmatprep.subr.mxu0 0.0
        %700 = vmatpush1.msra.mxu0 0.0
        %701 = vmatprep.subr.mxu0 0.0
        %702 = vmatpush1.msra.mxu0 0.0
        %703 = vmatprep.subr.mxu0 0.0
        %704 = vmatpush1.msra.mxu0 0.0
        %705 = vmatprep.subr.mxu0 0.0
        %706 = vmatpush1.msra.mxu0 0.0
        %707 = vmatprep.subr.mxu0 0.0
        %708 = vmatpush1.msra.mxu0 0.0
        %709 = vmatprep.subr.mxu0 0.0
        %710 = vmatpush1.msra.mxu0 0.0
        %711 = vmatprep.subr.mxu0 0.0
        %712 = vmatpush1.msra.mxu0 0.0
        %713 = vmatprep.subr.mxu0 0.0
        %714 = vmatpush1.msra.mxu0 0.0
        %715 = vmatprep.subr.mxu0 0.0
        %716 = vmatpush1.msra.mxu0 0.0
        %717 = vmatprep.subr.mxu0 0.0
        %718 = vmatpush1.msra.mxu0 0.0
        %719 = vmatprep.subr.mxu0 0.0
        %720 = vmatpush1.msra.mxu0 0.0
        %721 = vmatprep.subr.mxu0 0.0
        %722 = vmatpush1.msra.mxu0 0.0
        %723 = vmatprep.subr.mxu0 0.0
        %724 = vmatpush1.msra.mxu0 0.0
        %725 = vmatprep.subr.mxu0 0.0
        %726 = vmatpush1.msra.mxu0 0.0
        %727 = vmatprep.subr.mxu0 0.0
        %728 = vmatpush1.msra.mxu0 0.0
        %729 = vmatprep.subr.mxu0 0.0
        %730 = vmatpush1.msra.mxu0 0.0
        %731 = vmatprep.subr.mxu0 0.0
        %732 = vmatpush1.msra.mxu0 0.0
        %733 = vmatprep.subr.mxu0 0.0
        %734 = vmatpush1.msra.mxu0 0.0
        %735 = vmatprep.subr.mxu0 0.0
        %736 = vmatpush1.msra.mxu0 0.0
        %737 = vmatprep.subr.mxu0 0.0
        %738 = vmatpush1.msra.mxu0 0.0
        %739 = vmatprep.subr.mxu0 0.0
        %740 = vmatpush1.msra.mxu0 0.0
        %741 = vmatprep.subr.mxu0 0.0
        %742 = vmatpush1.msra.mxu0 0.0
        %743 = vmatprep.subr.mxu0 0.0
        %744 = vmatpush1.msra.mxu0 0.0
        %745 = vmatprep.subr.mxu0 0.0
        %746 = vmatpush1.msra.mxu0 0.0
        %747 = vmatprep.subr.mxu0 0.0
        %748 = vmatpush1.msra.mxu0 0.0
        %749 = vmatprep.subr.mxu0 0.0
        %750 = vmatpush1.msra.mxu0 0.0
        %751 = vmatprep.mubr.f32.mxu0 0.0
        %752 = vmatmul.mubr.f32.gmra.mrb[0].mxu0 %v685
        %v753 = vpop.f32.mrb[0].mxu0
        %v754 = vadd.f32 0.0, %v753
        %v755 = vpop.f32.mrb[0].mxu0
        %756 = vdwg.mxu0
        %757 = vrot.lane.b32.xlu0 %v587, 120
        %v758 = vpop.permute.xlu0 %757
        %759 = vrot.lane.b32.xlu0 %v587, 88
        %v760 = vpop.permute.xlu0 %759
        %v761 = vsel %vm593, %v758, 0
        %v763 = vsel %vm593, %v760, 0
        %765 = vmatprep.subr.mxu0 0.0
        %766 = vmatpush1.xpose.msra.mxu0 %v763
        %767 = vmatprep.subr.mxu0 0.0
        %768 = vmatpush1.xpose.msra.mxu0 0.0
        %769 = vmatprep.subr.mxu0 0.0
        %770 = vmatpush1.xpose.msra.mxu0 0.0
        %771 = vmatprep.subr.mxu0 0.0
        %772 = vmatpush1.xpose.msra.mxu0 0.0
        %773 = vmatprep.subr.mxu0 0.0
        %774 = vmatpush1.xpose.msra.mxu0 0.0
        %775 = vmatprep.subr.mxu0 0.0
        %776 = vmatpush1.xpose.msra.mxu0 0.0
        %777 = vmatprep.subr.mxu0 0.0
        %778 = vmatpush1.xpose.msra.mxu0 0.0
        %779 = vmatprep.subr.mxu0 0.0
        %780 = vmatpush1.xpose.msra.mxu0 0.0
        %781 = vmatprep.subr.mxu0 0.0
        %782 = vmatpush1.xpose.msra.mxu0 0.0
        %783 = vmatprep.subr.mxu0 0.0
        %784 = vmatpush1.xpose.msra.mxu0 0.0
        %785 = vmatprep.subr.mxu0 0.0
        %786 = vmatpush1.xpose.msra.mxu0 0.0
        %787 = vmatprep.subr.mxu0 0.0
        %788 = vmatpush1.xpose.msra.mxu0 0.0
        %789 = vmatprep.subr.mxu0 0.0
        %790 = vmatpush1.xpose.msra.mxu0 0.0
        %791 = vmatprep.subr.mxu0 0.0
        %792 = vmatpush1.xpose.msra.mxu0 0.0
        %793 = vmatprep.subr.mxu0 0.0
        %794 = vmatpush1.xpose.msra.mxu0 0.0
        %795 = vmatprep.subr.mxu0 0.0
        %796 = vmatpush1.xpose.msra.mxu0 0.0
        %797 = vmatprep.subr.mxu0 0.0
        %798 = vmatpush1.xpose.msra.mxu0 0.0
        %799 = vmatprep.subr.mxu0 0.0
        %800 = vmatpush1.xpose.msra.mxu0 0.0
        %801 = vmatprep.subr.mxu0 0.0
        %802 = vmatpush1.xpose.msra.mxu0 0.0
        %803 = vmatprep.subr.mxu0 0.0
        %804 = vmatpush1.xpose.msra.mxu0 0.0
        %805 = vmatprep.subr.mxu0 0.0
        %806 = vmatpush1.xpose.msra.mxu0 0.0
        %807 = vmatprep.subr.mxu0 0.0
        %808 = vmatpush1.xpose.msra.mxu0 0.0
        %809 = vmatprep.subr.mxu0 0.0
        %810 = vmatpush1.xpose.msra.mxu0 0.0
        %811 = vmatprep.subr.mxu0 0.0
        %812 = vmatpush1.xpose.msra.mxu0 0.0
        %813 = vmatprep.subr.mxu0 0.0
        %814 = vmatpush1.xpose.msra.mxu0 0.0
        %815 = vmatprep.subr.mxu0 0.0
        %816 = vmatpush1.xpose.msra.mxu0 0.0
        %817 = vmatprep.subr.mxu0 0.0
        %818 = vmatpush1.xpose.msra.mxu0 0.0
        %819 = vmatprep.subr.mxu0 0.0
        %820 = vmatpush1.xpose.msra.mxu0 0.0
        %821 = vmatprep.subr.mxu0 0.0
        %822 = vmatpush1.xpose.msra.mxu0 0.0
        %823 = vmatprep.subr.mxu0 0.0
        %824 = vmatpush1.xpose.msra.mxu0 0.0
        %825 = vmatprep.subr.mxu0 0.0
        %826 = vmatpush1.xpose.msra.mxu0 0.0
        %827 = vmatprep.subr.mxu0 0.0
        %828 = vmatpush1.xpose.msra.mxu0 0.0
        %829 = vmatprep.mubr.f32.mxu0 0.0
        %830 = vmatmul.mubr.f32.gmra.mrb[0].mxu0 %v761
        %v831 = vpop.f32.mrb[0].mxu0
        %v832 = vadd.f32 0.0, %v831
        %v833 = vpop.f32.mrb[0].mxu0
        %834 = vdwg.mxu0
        %v835 = vmul.f32 %v832, 0.35355338
        %v836 = vsel %vm593, %v835, -inf
        %837 = vmax.xlane.f32.xlu0 %v836
        %v838 = vpop.xlane.xlu0 %837
        %v839 = vsub.f32 %v835, %v838
        %v840 = vmul.f32 %v839, 1.442695
        %v841 = vpow.pop %v840
        %v842 = vsel %vm593, %v841, 0.0
        %843 = vadd.xlane.f32.xlu0 %v842
        %v844 = vpop.xlane.xlu0 %843
        %v845 = vrcp.pop %v844
        %v846 = vmul.f32 %v841, %v845
        %s847 = scalar_lea.vmem %s469, 8 [#allocation4]
        %848 = vst.msk [vmem:[%s847] sm:$0xff] %vm593, %v846
        %849 = vrot.lane.b32.xlu0 %v587, 56
        %v850 = vpop.permute.xlu0 %849
        %v853 = vsel %vm593, %v846, 0
        %855 = vmatprep.subr.mxu0 0.0
        %856 = vmatpush1.msra.mxu0 %v850
        %857 = vmatprep.subr.mxu0 0.0
        %858 = vmatpush1.msra.mxu0 0.0
        %859 = vmatprep.subr.mxu0 0.0
        %860 = vmatpush1.msra.mxu0 0.0
        %861 = vmatprep.subr.mxu0 0.0
        %862 = vmatpush1.msra.mxu0 0.0
        %863 = vmatprep.subr.mxu0 0.0
        %864 = vmatpush1.msra.mxu0 0.0
        %865 = vmatprep.subr.mxu0 0.0
        %866 = vmatpush1.msra.mxu0 0.0
        %867 = vmatprep.subr.mxu0 0.0
        %868 = vmatpush1.msra.mxu0 0.0
        %869 = vmatprep.subr.mxu0 0.0
        %870 = vmatpush1.msra.mxu0 0.0
        %871 = vmatprep.subr.mxu0 0.0
        %872 = vmatpush1.msra.mxu0 0.0
        %873 = vmatprep.subr.mxu0 0.0
        %874 = vmatpush1.msra.mxu0 0.0
        %875 = vmatprep.subr.mxu0 0.0
        %876 = vmatpush1.msra.mxu0 0.0
        %877 = vmatprep.subr.mxu0 0.0
        %878 = vmatpush1.msra.mxu0 0.0
        %879 = vmatprep.subr.mxu0 0.0
        %880 = vmatpush1.msra.mxu0 0.0
        %881 = vmatprep.subr.mxu0 0.0
        %882 = vmatpush1.msra.mxu0 0.0
        %883 = vmatprep.subr.mxu0 0.0
        %884 = vmatpush1.msra.mxu0 0.0
        %885 = vmatprep.subr.mxu0 0.0
        %886 = vmatpush1.msra.mxu0 0.0
        %887 = vmatprep.subr.mxu0 0.0
        %888 = vmatpush1.msra.mxu0 0.0
        %889 = vmatprep.subr.mxu0 0.0
        %890 = vmatpush1.msra.mxu0 0.0
        %891 = vmatprep.subr.mxu0 0.0
        %892 = vmatpush1.msra.mxu0 0.0
        %893 = vmatprep.subr.mxu0 0.0
        %894 = vmatpush1.msra.mxu0 0.0
        %895 = vmatprep.subr.mxu0 0.0
        %896 = vmatpush1.msra.mxu0 0.0
        %897 = vmatprep.subr.mxu0 0.0
        %898 = vmatpush1.msra.mxu0 0.0
        %899 = vmatprep.subr.mxu0 0.0
        %900 = vmatpush1.msra.mxu0 0.0
        %901 = vmatprep.subr.mxu0 0.0
        %902 = vmatpush1.msra.mxu0 0.0
        %903 = vmatprep.subr.mxu0 0.0
        %904 = vmatpush1.msra.mxu0 0.0
        %905 = vmatprep.subr.mxu0 0.0
        %906 = vmatpush1.msra.mxu0 0.0
        %907 = vmatprep.subr.mxu0 0.0
        %908 = vmatpush1.msra.mxu0 0.0
        %909 = vmatprep.subr.mxu0 0.0
        %910 = vmatpush1.msra.mxu0 0.0
        %911 = vmatprep.subr.mxu0 0.0
        %912 = vmatpush1.msra.mxu0 0.0
        %913 = vmatprep.subr.mxu0 0.0
        %914 = vmatpush1.msra.mxu0 0.0
        %915 = vmatprep.subr.mxu0 0.0
        %916 = vmatpush1.msra.mxu0 0.0
        %917 = vmatprep.subr.mxu0 0.0
        %918 = vmatpush1.msra.mxu0 0.0
        %919 = vmatprep.mubr.f32.mxu0 0.0
        %920 = vmatmul.mubr.f32.gmra.mrb[0].mxu0 %v853
        %v921 = vpop.f32.mrb[0].mxu0
        %v922 = vadd.f32 0.0, %v921
        %v923 = vpop.f32.mrb[0].mxu0
        %924 = vdwg.mxu0
        %925 = vrot.lane.b32.xlu0 %v587, 112
        %v926 = vpop.permute.xlu0 %925
        %927 = vrot.lane.b32.xlu0 %v587, 80
        %v928 = vpop.permute.xlu0 %927
        %v929 = vsel %vm593, %v926, 0
        %v931 = vsel %vm593, %v928, 0
        %933 = vmatprep.subr.mxu0 0.0
        %934 = vmatpush1.xpose.msra.mxu0 %v931
        %935 = vmatprep.subr.mxu0 0.0
        %936 = vmatpush1.xpose.msra.mxu0 0.0
        %937 = vmatprep.subr.mxu0 0.0
        %938 = vmatpush1.xpose.msra.mxu0 0.0
        %939 = vmatprep.subr.mxu0 0.0
        %940 = vmatpush1.xpose.msra.mxu0 0.0
        %941 = vmatprep.subr.mxu0 0.0
        %942 = vmatpush1.xpose.msra.mxu0 0.0
        %943 = vmatprep.subr.mxu0 0.0
        %944 = vmatpush1.xpose.msra.mxu0 0.0
        %945 = vmatprep.subr.mxu0 0.0
        %946 = vmatpush1.xpose.msra.mxu0 0.0
        %947 = vmatprep.subr.mxu0 0.0
        %948 = vmatpush1.xpose.msra.mxu0 0.0
        %949 = vmatprep.subr.mxu0 0.0
        %950 = vmatpush1.xpose.msra.mxu0 0.0
        %951 = vmatprep.subr.mxu0 0.0
        %952 = vmatpush1.xpose.msra.mxu0 0.0
        %953 = vmatprep.subr.mxu0 0.0
        %954 = vmatpush1.xpose.msra.mxu0 0.0
        %955 = vmatprep.subr.mxu0 0.0
        %956 = vmatpush1.xpose.msra.mxu0 0.0
        %957 = vmatprep.subr.mxu0 0.0
        %958 = vmatpush1.xpose.msra.mxu0 0.0
        %959 = vmatprep.subr.mxu0 0.0
        %960 = vmatpush1.xpose.msra.mxu0 0.0
        %961 = vmatprep.subr.mxu0 0.0
        %962 = vmatpush1.xpose.msra.mxu0 0.0
        %963 = vmatprep.subr.mxu0 0.0
        %964 = vmatpush1.xpose.msra.mxu0 0.0
        %965 = vmatprep.subr.mxu0 0.0
        %966 = vmatpush1.xpose.msra.mxu0 0.0
        %967 = vmatprep.subr.mxu0 0.0
        %968 = vmatpush1.xpose.msra.mxu0 0.0
        %969 = vmatprep.subr.mxu0 0.0
        %970 = vmatpush1.xpose.msra.mxu0 0.0
        %971 = vmatprep.subr.mxu0 0.0
        %972 = vmatpush1.xpose.msra.mxu0 0.0
        %973 = vmatprep.subr.mxu0 0.0
        %974 = vmatpush1.xpose.msra.mxu0 0.0
        %975 = vmatprep.subr.mxu0 0.0
        %976 = vmatpush1.xpose.msra.mxu0 0.0
        %977 = vmatprep.subr.mxu0 0.0
        %978 = vmatpush1.xpose.msra.mxu0 0.0
        %979 = vmatprep.subr.mxu0 0.0
        %980 = vmatpush1.xpose.msra.mxu0 0.0
        %981 = vmatprep.subr.mxu0 0.0
        %982 = vmatpush1.xpose.msra.mxu0 0.0
        %983 = vmatprep.subr.mxu0 0.0
        %984 = vmatpush1.xpose.msra.mxu0 0.0
        %985 = vmatprep.subr.mxu0 0.0
        %986 = vmatpush1.xpose.msra.mxu0 0.0
        %987 = vmatprep.subr.mxu0 0.0
        %988 = vmatpush1.xpose.msra.mxu0 0.0
        %989 = vmatprep.subr.mxu0 0.0
        %990 = vmatpush1.xpose.msra.mxu0 0.0
        %991 = vmatprep.subr.mxu0 0.0
        %992 = vmatpush1.xpose.msra.mxu0 0.0
        %993 = vmatprep.subr.mxu0 0.0
        %994 = vmatpush1.xpose.msra.mxu0 0.0
        %995 = vmatprep.subr.mxu0 0.0
        %996 = vmatpush1.xpose.msra.mxu0 0.0
        %997 = vmatprep.mubr.f32.mxu0 0.0
        %998 = vmatmul.mubr.f32.gmra.mrb[0].mxu0 %v929
        %v999 = vpop.f32.mrb[0].mxu0
        %v1000 = vadd.f32 0.0, %v999
        %v1001 = vpop.f32.mrb[0].mxu0
        %1002 = vdwg.mxu0
        %v1003 = vmul.f32 %v1000, 0.35355338
        %v1004 = vsel %vm593, %v1003, -inf
        %1005 = vmax.xlane.f32.xlu0 %v1004
        %v1006 = vpop.xlane.xlu0 %1005
        %v1007 = vsub.f32 %v1003, %v1006
        %v1008 = vmul.f32 %v1007, 1.442695
        %v1009 = vpow.pop %v1008
        %v1010 = vsel %vm593, %v1009, 0.0
        %1011 = vadd.xlane.f32.xlu0 %v1010
        %v1012 = vpop.xlane.xlu0 %1011
        %v1013 = vrcp.pop %v1012
        %v1014 = vmul.f32 %v1009, %v1013
        %s1015 = scalar_lea.vmem %s469, 16 [#allocation4]
        %1016 = vst.msk [vmem:[%s1015] sm:$0xff] %vm593, %v1014
        %1017 = vrot.lane.b32.xlu0 %v587, 48
        %v1018 = vpop.permute.xlu0 %1017
        %v1021 = vsel %vm593, %v1014, 0
        %1023 = vmatprep.subr.mxu0 0.0
        %1024 = vmatpush1.msra.mxu0 %v1018
        %1025 = vmatprep.subr.mxu0 0.0
        %1026 = vmatpush1.msra.mxu0 0.0
        %1027 = vmatprep.subr.mxu0 0.0
        %1028 = vmatpush1.msra.mxu0 0.0
        %1029 = vmatprep.subr.mxu0 0.0
        %1030 = vmatpush1.msra.mxu0 0.0
        %1031 = vmatprep.subr.mxu0 0.0
        %1032 = vmatpush1.msra.mxu0 0.0
        %1033 = vmatprep.subr.mxu0 0.0
        %1034 = vmatpush1.msra.mxu0 0.0
        %1035 = vmatprep.subr.mxu0 0.0
        %1036 = vmatpush1.msra.mxu0 0.0
        %1037 = vmatprep.subr.mxu0 0.0
        %1038 = vmatpush1.msra.mxu0 0.0
        %1039 = vmatprep.subr.mxu0 0.0
        %1040 = vmatpush1.msra.mxu0 0.0
        %1041 = vmatprep.subr.mxu0 0.0
        %1042 = vmatpush1.msra.mxu0 0.0
        %1043 = vmatprep.subr.mxu0 0.0
        %1044 = vmatpush1.msra.mxu0 0.0
        %1045 = vmatprep.subr.mxu0 0.0
        %1046 = vmatpush1.msra.mxu0 0.0
        %1047 = vmatprep.subr.mxu0 0.0
        %1048 = vmatpush1.msra.mxu0 0.0
        %1049 = vmatprep.subr.mxu0 0.0
        %1050 = vmatpush1.msra.mxu0 0.0
        %1051 = vmatprep.subr.mxu0 0.0
        %1052 = vmatpush1.msra.mxu0 0.0
        %1053 = vmatprep.subr.mxu0 0.0
        %1054 = vmatpush1.msra.mxu0 0.0
        %1055 = vmatprep.subr.mxu0 0.0
        %1056 = vmatpush1.msra.mxu0 0.0
        %1057 = vmatprep.subr.mxu0 0.0
        %1058 = vmatpush1.msra.mxu0 0.0
        %1059 = vmatprep.subr.mxu0 0.0
        %1060 = vmatpush1.msra.mxu0 0.0
        %1061 = vmatprep.subr.mxu0 0.0
        %1062 = vmatpush1.msra.mxu0 0.0
        %1063 = vmatprep.subr.mxu0 0.0
        %1064 = vmatpush1.msra.mxu0 0.0
        %1065 = vmatprep.subr.mxu0 0.0
        %1066 = vmatpush1.msra.mxu0 0.0
        %1067 = vmatprep.subr.mxu0 0.0
        %1068 = vmatpush1.msra.mxu0 0.0
        %1069 = vmatprep.subr.mxu0 0.0
        %1070 = vmatpush1.msra.mxu0 0.0
        %1071 = vmatprep.subr.mxu0 0.0
        %1072 = vmatpush1.msra.mxu0 0.0
        %1073 = vmatprep.subr.mxu0 0.0
        %1074 = vmatpush1.msra.mxu0 0.0
        %1075 = vmatprep.subr.mxu0 0.0
        %1076 = vmatpush1.msra.mxu0 0.0
        %1077 = vmatprep.subr.mxu0 0.0
        %1078 = vmatpush1.msra.mxu0 0.0
        %1079 = vmatprep.subr.mxu0 0.0
        %1080 = vmatpush1.msra.mxu0 0.0
        %1081 = vmatprep.subr.mxu0 0.0
        %1082 = vmatpush1.msra.mxu0 0.0
        %1083 = vmatprep.subr.mxu0 0.0
        %1084 = vmatpush1.msra.mxu0 0.0
        %1085 = vmatprep.subr.mxu0 0.0
        %1086 = vmatpush1.msra.mxu0 0.0
        %1087 = vmatprep.mubr.f32.mxu0 0.0
        %1088 = vmatmul.mubr.f32.gmra.mrb[0].mxu0 %v1021
        %v1089 = vpop.f32.mrb[0].mxu0
        %v1090 = vadd.f32 0.0, %v1089
        %v1091 = vpop.f32.mrb[0].mxu0
        %1092 = vdwg.mxu0
        %1093 = vrot.lane.b32.xlu0 %v587, 104
        %v1094 = vpop.permute.xlu0 %1093
        %1095 = vrot.lane.b32.xlu0 %v587, 72
        %v1096 = vpop.permute.xlu0 %1095
        %v1097 = vsel %vm593, %v1094, 0
        %v1099 = vsel %vm593, %v1096, 0
        %1101 = vmatprep.subr.mxu0 0.0
        %1102 = vmatpush1.xpose.msra.mxu0 %v1099
        %1103 = vmatprep.subr.mxu0 0.0
        %1104 = vmatpush1.xpose.msra.mxu0 0.0
        %1105 = vmatprep.subr.mxu0 0.0
        %1106 = vmatpush1.xpose.msra.mxu0 0.0
        %1107 = vmatprep.subr.mxu0 0.0
        %1108 = vmatpush1.xpose.msra.mxu0 0.0
        %1109 = vmatprep.subr.mxu0 0.0
        %1110 = vmatpush1.xpose.msra.mxu0 0.0
        %1111 = vmatprep.subr.mxu0 0.0
        %1112 = vmatpush1.xpose.msra.mxu0 0.0
        %1113 = vmatprep.subr.mxu0 0.0
        %1114 = vmatpush1.xpose.msra.mxu0 0.0
        %1115 = vmatprep.subr.mxu0 0.0
        %1116 = vmatpush1.xpose.msra.mxu0 0.0
        %1117 = vmatprep.subr.mxu0 0.0
        %1118 = vmatpush1.xpose.msra.mxu0 0.0
        %1119 = vmatprep.subr.mxu0 0.0
        %1120 = vmatpush1.xpose.msra.mxu0 0.0
        %1121 = vmatprep.subr.mxu0 0.0
        %1122 = vmatpush1.xpose.msra.mxu0 0.0
        %1123 = vmatprep.subr.mxu0 0.0
        %1124 = vmatpush1.xpose.msra.mxu0 0.0
        %1125 = vmatprep.subr.mxu0 0.0
        %1126 = vmatpush1.xpose.msra.mxu0 0.0
        %1127 = vmatprep.subr.mxu0 0.0
        %1128 = vmatpush1.xpose.msra.mxu0 0.0
        %1129 = vmatprep.subr.mxu0 0.0
        %1130 = vmatpush1.xpose.msra.mxu0 0.0
        %1131 = vmatprep.subr.mxu0 0.0
        %1132 = vmatpush1.xpose.msra.mxu0 0.0
        %1133 = vmatprep.subr.mxu0 0.0
        %1134 = vmatpush1.xpose.msra.mxu0 0.0
        %1135 = vmatprep.subr.mxu0 0.0
        %1136 = vmatpush1.xpose.msra.mxu0 0.0
        %1137 = vmatprep.subr.mxu0 0.0
        %1138 = vmatpush1.xpose.msra.mxu0 0.0
        %1139 = vmatprep.subr.mxu0 0.0
        %1140 = vmatpush1.xpose.msra.mxu0 0.0
        %1141 = vmatprep.subr.mxu0 0.0
        %1142 = vmatpush1.xpose.msra.mxu0 0.0
        %1143 = vmatprep.subr.mxu0 0.0
        %1144 = vmatpush1.xpose.msra.mxu0 0.0
        %1145 = vmatprep.subr.mxu0 0.0
        %1146 = vmatpush1.xpose.msra.mxu0 0.0
        %1147 = vmatprep.subr.mxu0 0.0
        %1148 = vmatpush1.xpose.msra.mxu0 0.0
        %1149 = vmatprep.subr.mxu0 0.0
        %1150 = vmatpush1.xpose.msra.mxu0 0.0
        %1151 = vmatprep.subr.mxu0 0.0
        %1152 = vmatpush1.xpose.msra.mxu0 0.0
        %1153 = vmatprep.subr.mxu0 0.0
        %1154 = vmatpush1.xpose.msra.mxu0 0.0
        %1155 = vmatprep.subr.mxu0 0.0
        %1156 = vmatpush1.xpose.msra.mxu0 0.0
        %1157 = vmatprep.subr.mxu0 0.0
        %1158 = vmatpush1.xpose.msra.mxu0 0.0
        %1159 = vmatprep.subr.mxu0 0.0
        %1160 = vmatpush1.xpose.msra.mxu0 0.0
        %1161 = vmatprep.subr.mxu0 0.0
        %1162 = vmatpush1.xpose.msra.mxu0 0.0
        %1163 = vmatprep.subr.mxu0 0.0
        %1164 = vmatpush1.xpose.msra.mxu0 0.0
        %1165 = vmatprep.mubr.f32.mxu0 0.0
        %1166 = vmatmul.mubr.f32.gmra.mrb[0].mxu0 %v1097
        %v1167 = vpop.f32.mrb[0].mxu0
        %v1168 = vadd.f32 0.0, %v1167
        %v1169 = vpop.f32.mrb[0].mxu0
        %1170 = vdwg.mxu0
        %v1171 = vmul.f32 %v1168, 0.35355338
        %v1172 = vsel %vm593, %v1171, -inf
        %1173 = vmax.xlane.f32.xlu0 %v1172
        %v1174 = vpop.xlane.xlu0 %1173
        %v1175 = vsub.f32 %v1171, %v1174
        %v1176 = vmul.f32 %v1175, 1.442695
        %v1177 = vpow.pop %v1176
        %v1178 = vsel %vm593, %v1177, 0.0
        %1179 = vadd.xlane.f32.xlu0 %v1178
        %v1180 = vpop.xlane.xlu0 %1179
        %v1181 = vrcp.pop %v1180
        %v1182 = vmul.f32 %v1177, %v1181
        %s1183 = scalar_lea.vmem %s469, 24 [#allocation4]
        %1184 = vst.msk [vmem:[%s1183] sm:$0xff] %vm593, %v1182
        %1185 = vrot.lane.b32.xlu0 %v587, 40
        %v1186 = vpop.permute.xlu0 %1185
        %v1189 = vsel %vm593, %v1182, 0
        %1191 = vmatprep.subr.mxu0 0.0
        %1192 = vmatpush1.msra.mxu0 %v1186
        %1193 = vmatprep.subr.mxu0 0.0
        %1194 = vmatpush1.msra.mxu0 0.0
        %1195 = vmatprep.subr.mxu0 0.0
        %1196 = vmatpush1.msra.mxu0 0.0
        %1197 = vmatprep.subr.mxu0 0.0
        %1198 = vmatpush1.msra.mxu0 0.0
        %1199 = vmatprep.subr.mxu0 0.0
        %1200 = vmatpush1.msra.mxu0 0.0
        %1201 = vmatprep.subr.mxu0 0.0
        %1202 = vmatpush1.msra.mxu0 0.0
        %1203 = vmatprep.subr.mxu0 0.0
        %1204 = vmatpush1.msra.mxu0 0.0
        %1205 = vmatprep.subr.mxu0 0.0
        %1206 = vmatpush1.msra.mxu0 0.0
        %1207 = vmatprep.subr.mxu0 0.0
        %1208 = vmatpush1.msra.mxu0 0.0
        %1209 = vmatprep.subr.mxu0 0.0
        %1210 = vmatpush1.msra.mxu0 0.0
        %1211 = vmatprep.subr.mxu0 0.0
        %1212 = vmatpush1.msra.mxu0 0.0
        %1213 = vmatprep.subr.mxu0 0.0
        %1214 = vmatpush1.msra.mxu0 0.0
        %1215 = vmatprep.subr.mxu0 0.0
        %1216 = vmatpush1.msra.mxu0 0.0
        %1217 = vmatprep.subr.mxu0 0.0
        %1218 = vmatpush1.msra.mxu0 0.0
        %1219 = vmatprep.subr.mxu0 0.0
        %1220 = vmatpush1.msra.mxu0 0.0
        %1221 = vmatprep.subr.mxu0 0.0
        %1222 = vmatpush1.msra.mxu0 0.0
        %1223 = vmatprep.subr.mxu0 0.0
        %1224 = vmatpush1.msra.mxu0 0.0
        %1225 = vmatprep.subr.mxu0 0.0
        %1226 = vmatpush1.msra.mxu0 0.0
        %1227 = vmatprep.subr.mxu0 0.0
        %1228 = vmatpush1.msra.mxu0 0.0
        %1229 = vmatprep.subr.mxu0 0.0
        %1230 = vmatpush1.msra.mxu0 0.0
        %1231 = vmatprep.subr.mxu0 0.0
        %1232 = vmatpush1.msra.mxu0 0.0
        %1233 = vmatprep.subr.mxu0 0.0
        %1234 = vmatpush1.msra.mxu0 0.0
        %1235 = vmatprep.subr.mxu0 0.0
        %1236 = vmatpush1.msra.mxu0 0.0
        %1237 = vmatprep.subr.mxu0 0.0
        %1238 = vmatpush1.msra.mxu0 0.0
        %1239 = vmatprep.subr.mxu0 0.0
        %1240 = vmatpush1.msra.mxu0 0.0
        %1241 = vmatprep.subr.mxu0 0.0
        %1242 = vmatpush1.msra.mxu0 0.0
        %1243 = vmatprep.subr.mxu0 0.0
        %1244 = vmatpush1.msra.mxu0 0.0
        %1245 = vmatprep.subr.mxu0 0.0
        %1246 = vmatpush1.msra.mxu0 0.0
        %1247 = vmatprep.subr.mxu0 0.0
        %1248 = vmatpush1.msra.mxu0 0.0
        %1249 = vmatprep.subr.mxu0 0.0
        %1250 = vmatpush1.msra.mxu0 0.0
        %1251 = vmatprep.subr.mxu0 0.0
        %1252 = vmatpush1.msra.mxu0 0.0
        %1253 = vmatprep.subr.mxu0 0.0
        %1254 = vmatpush1.msra.mxu0 0.0
        %1255 = vmatprep.mubr.f32.mxu0 0.0
        %1256 = vmatmul.mubr.f32.gmra.mrb[0].mxu0 %v1189
        %v1257 = vpop.f32.mrb[0].mxu0
        %v1258 = vadd.f32 0.0, %v1257
        %v1259 = vpop.f32.mrb[0].mxu0
        %1260 = vdwg.mxu0
        %1262 = vrot.lane.b32.xlu0 %v922, 8
        %v1263 = vpop.permute.xlu0 %1262
        %1266 = vrot.lane.b32.xlu0 %v1090, 16
        %v1267 = vpop.permute.xlu0 %1266
        %1270 = vrot.lane.b32.xlu0 %v1258, 24
        %v1271 = vpop.permute.xlu0 %1270
        %v1273 = vsel %vm593, %v754, %v1263
        %vm1274 = vcmask 130048
        %v1275 = vsel %vm1274, %v1273, %v1267
        %vm1276 = vcmask 195584
        %v1277 = vsel %vm1276, %v1275, %v1271
        %v1278 = vld [vmem:[%s5] sm:$0xff]
        %v1279 = vld [vmem:[%s5 + $0x8] sm:$0xff]
        %v1280 = vld [vmem:[%s5 + $0x10] sm:$0xff]
        %v1281 = vld [vmem:[%s5 + $0x18] sm:$0xff]
        %v1282 = vld [vmem:[%s6] sm:$0x1]
        %v1284 = vlaneseq
        %v1285 = vshrl.u32 %v1284, 7
        %v1286 = vsub.s32 0, %v1285
        %v1287 = vrot.slane %v1282, %v1286
        %v1290 = vsel %vm475, %v1277, 0
        %1292 = vmatprep.subr.mxu0 0.0
        %1293 = vmatpush1.msra.mxu0 %v1278
        %1294 = vmatprep.subr.mxu0 0.0
        %1295 = vmatpush1.msra.mxu0 %v1279
        %1296 = vmatprep.subr.mxu0 0.0
        %1297 = vmatpush1.msra.mxu0 %v1280
        %1298 = vmatprep.subr.mxu0 0.0
        %1299 = vmatpush1.msra.mxu0 %v1281
        %1300 = vmatprep.subr.mxu0 0.0
        %1301 = vmatpush1.msra.mxu0 0.0
        %1302 = vmatprep.subr.mxu0 0.0
        %1303 = vmatpush1.msra.mxu0 0.0
        %1304 = vmatprep.subr.mxu0 0.0
        %1305 = vmatpush1.msra.mxu0 0.0
        %1306 = vmatprep.subr.mxu0 0.0
        %1307 = vmatpush1.msra.mxu0 0.0
        %1308 = vmatprep.subr.mxu0 0.0
        %1309 = vmatpush1.msra.mxu0 0.0
        %1310 = vmatprep.subr.mxu0 0.0
        %1311 = vmatpush1.msra.mxu0 0.0
        %1312 = vmatprep.subr.mxu0 0.0
        %1313 = vmatpush1.msra.mxu0 0.0
        %1314 = vmatprep.subr.mxu0 0.0
        %1315 = vmatpush1.msra.mxu0 0.0
        %1316 = vmatprep.subr.mxu0 0.0
        %1317 = vmatpush1.msra.mxu0 0.0
        %1318 = vmatprep.subr.mxu0 0.0
        %1319 = vmatpush1.msra.mxu0 0.0
        %1320 = vmatprep.subr.mxu0 0.0
        %1321 = vmatpush1.msra.mxu0 0.0
        %1322 = vmatprep.subr.mxu0 0.0
        %1323 = vmatpush1.msra.mxu0 0.0
        %1324 = vmatprep.subr.mxu0 0.0
        %1325 = vmatpush1.msra.mxu0 0.0
        %1326 = vmatprep.subr.mxu0 0.0
        %1327 = vmatpush1.msra.mxu0 0.0
        %1328 = vmatprep.subr.mxu0 0.0
        %1329 = vmatpush1.msra.mxu0 0.0
        %1330 = vmatprep.subr.mxu0 0.0
        %1331 = vmatpush1.msra.mxu0 0.0
        %1332 = vmatprep.subr.mxu0 0.0
        %1333 = vmatpush1.msra.mxu0 0.0
        %1334 = vmatprep.subr.mxu0 0.0
        %1335 = vmatpush1.msra.mxu0 0.0
        %1336 = vmatprep.subr.mxu0 0.0
        %1337 = vmatpush1.msra.mxu0 0.0
        %1338 = vmatprep.subr.mxu0 0.0
        %1339 = vmatpush1.msra.mxu0 0.0
        %1340 = vmatprep.subr.mxu0 0.0
        %1341 = vmatpush1.msra.mxu0 0.0
        %1342 = vmatprep.subr.mxu0 0.0
        %1343 = vmatpush1.msra.mxu0 0.0
        %1344 = vmatprep.subr.mxu0 0.0
        %1345 = vmatpush1.msra.mxu0 0.0
        %1346 = vmatprep.subr.mxu0 0.0
        %1347 = vmatpush1.msra.mxu0 0.0
        %1348 = vmatprep.subr.mxu0 0.0
        %1349 = vmatpush1.msra.mxu0 0.0
        %1350 = vmatprep.subr.mxu0 0.0
        %1351 = vmatpush1.msra.mxu0 0.0
        %1352 = vmatprep.subr.mxu0 0.0
        %1353 = vmatpush1.msra.mxu0 0.0
        %1354 = vmatprep.subr.mxu0 0.0
        %1355 = vmatpush1.msra.mxu0 0.0
        %1356 = vmatprep.mubr.f32.mxu0 0.0
        %1357 = vmatmul.mubr.f32.gmra.mrb[0].mxu0 %v1290
        %v1358 = vpop.f32.mrb[0].mxu0
        %v1359 = vadd.f32 %v1287, %v1358
        %v1360 = vpop.f32.mrb[0].mxu0
        %1361 = vdwg.mxu0
        %v1362 = vadd.f32 %v474, %v1359
        %v1363 = vsel %vm475, %v1362, 0.0
        %1364 = vadd.xlane.f32.xlu0 %v1363
        %v1365 = vpop.xlane.xlu0 %1364
        %v1366 = vmul.f32 %v1365, %v479
        %v1367 = vsub.f32 %v1362, %v1366
        %v1368 = vmul.f32 %v1367, %v1367
        %v1369 = vsel %vm475, %v1368, 0.0
        %1370 = vadd.xlane.f32.xlu0 %v1369
        %v1371 = vpop.xlane.xlu0 %1370
        %v1372 = vmul.f32 %v1371, %v479
        %v1373 = vadd.f32 %v1372, 1e-05
        %v1374 = vrsqrt.pop %v1373
        %v1375 = vmul.f32 %v1367, %v1374
        %v1376 = vld [vmem:[%s7] sm:$0x1]
        %v1378 = vlaneseq
        %v1379 = vshrl.u32 %v1378, 7
        %v1380 = vsub.s32 0, %v1379
        %v1381 = vrot.slane %v1376, %v1380
        %v1383 = vmul.f32 %v1375, %v1381
        %v1384 = vld [vmem:[%s8] sm:$0x1]
        %v1386 = vlaneseq
        %v1387 = vshrl.u32 %v1386, 7
        %v1388 = vsub.s32 0, %v1387
        %v1389 = vrot.slane %v1384, %v1388
        %v1391 = vadd.f32 %v1383, %v1389
        %v1392 = vld [vmem:[%s9] sm:$0xff]
        %v1393 = vld [vmem:[%s9 + $0x8] sm:$0xff]
        %v1394 = vld [vmem:[%s9 + $0x10] sm:$0xff]
        %v1395 = vld [vmem:[%s9 + $0x18] sm:$0xff]
        %v1396 = vld [vmem:[%s10] sm:$0x1]
        %v1398 = vlaneseq
        %v1399 = vshrl.u32 %v1398, 7
        %v1400 = vsub.s32 0, %v1399
        %v1401 = vrot.slane %v1396, %v1400
        %v1404 = vsel %vm475, %v1391, 0
        %1406 = vmatprep.subr.mxu0 0.0
        %1407 = vmatpush1.msra.mxu0 %v1392
        %1408 = vmatprep.subr.mxu0 0.0
        %1409 = vmatpush1.msra.mxu0 %v1393
        %1410 = vmatprep.subr.mxu0 0.0
        %1411 = vmatpush1.msra.mxu0 %v1394
        %1412 = vmatprep.subr.mxu0 0.0
        %1413 = vmatpush1.msra.mxu0 %v1395
        %1414 = vmatprep.subr.mxu0 0.0
        %1415 = vmatpush1.msra.mxu0 0.0
        %1416 = vmatprep.subr.mxu0 0.0
        %1417 = vmatpush1.msra.mxu0 0.0
        %1418 = vmatprep.subr.mxu0 0.0
        %1419 = vmatpush1.msra.mxu0 0.0
        %1420 = vmatprep.subr.mxu0 0.0
        %1421 = vmatpush1.msra.mxu0 0.0
        %1422 = vmatprep.subr.mxu0 0.0
        %1423 = vmatpush1.msra.mxu0 0.0
        %1424 = vmatprep.subr.mxu0 0.0
        %1425 = vmatpush1.msra.mxu0 0.0
        %1426 = vmatprep.subr.mxu0 0.0
        %1427 = vmatpush1.msra.mxu0 0.0
        %1428 = vmatprep.subr.mxu0 0.0
        %1429 = vmatpush1.msra.mxu0 0.0
        %1430 = vmatprep.subr.mxu0 0.0
        %1431 = vmatpush1.msra.mxu0 0.0
        %1432 = vmatprep.subr.mxu0 0.0
        %1433 = vmatpush1.msra.mxu0 0.0
        %1434 = vmatprep.subr.mxu0 0.0
        %1435 = vmatpush1.msra.mxu0 0.0
        %1436 = vmatprep.subr.mxu0 0.0
        %1437 = vmatpush1.msra.mxu0 0.0
        %1438 = vmatprep.subr.mxu0 0.0
        %1439 = vmatpush1.msra.mxu0 0.0
        %1440 = vmatprep.subr.mxu0 0.0
        %1441 = vmatpush1.msra.mxu0 0.0
        %1442 = vmatprep.subr.mxu0 0.0
        %1443 = vmatpush1.msra.mxu0 0.0
        %1444 = vmatprep.subr.mxu0 0.0
        %1445 = vmatpush1.msra.mxu0 0.0
        %1446 = vmatprep.subr.mxu0 0.0
        %1447 = vmatpush1.msra.mxu0 0.0
        %1448 = vmatprep.subr.mxu0 0.0
        %1449 = vmatpush1.msra.mxu0 0.0
        %1450 = vmatprep.subr.mxu0 0.0
        %1451 = vmatpush1.msra.mxu0 0.0
        %1452 = vmatprep.subr.mxu0 0.0
        %1453 = vmatpush1.msra.mxu0 0.0
        %1454 = vmatprep.subr.mxu0 0.0
        %1455 = vmatpush1.msra.mxu0 0.0
        %1456 = vmatprep.subr.mxu0 0.0
        %1457 = vmatpush1.msra.mxu0 0.0
        %1458 = vmatprep.subr.mxu0 0.0
        %1459 = vmatpush1.msra.mxu0 0.0
        %1460 = vmatprep.subr.mxu0 0.0
        %1461 = vmatpush1.msra.mxu0 0.0
        %1462 = vmatprep.subr.mxu0 0.0
        %1463 = vmatpush1.msra.mxu0 0.0
        %1464 = vmatprep.subr.mxu0 0.0
        %1465 = vmatpush1.msra.mxu0 0.0
        %1466 = vmatprep.subr.mxu0 0.0
        %1467 = vmatpush1.msra.mxu0 0.0
        %1468 = vmatprep.subr.mxu0 0.0
        %1469 = vmatpush1.msra.mxu0 0.0
        %1470 = vmatprep.mubr.f32.mxu0 0.0
        %1471 = vmatmul.mubr.f32.gmra.mrb[0].mxu0 %v1404
        %v1472 = vpop.f32.mrb[0].mxu0
        %v1473 = vadd.f32 %v1401, %v1472
        %v1474 = vpop.f32.mrb[0].mxu0
        %1475 = vdwg.mxu0
        %v1476 = vmul.f32 %v1473, 0.5
        %v1477 = vmul.f32 %v1473, 0.70710677
        %vm1478 = vcmp.ge.f32.partialorder %v1477, 0.0
        %v1479 = vsel %vm1478, 1.0, -1.0
        %v1480 = vand.u32 2147483647, %v1477
        %v1481 = vmul.f32 %v1480, 0.3275911
        %v1482 = vadd.f32 %v1481, 1.0
        %v1483 = vrcp.pop %v1482
        %v1484 = vmul.f32 1.0, %v1483
        %v1485 = vmul.f32 %v1484, 1.0614054
        %v1486 = vadd.f32 %v1485, -1.4531521
        %v1487 = vmul.f32 %v1486, %v1484
        %v1488 = vadd.f32 %v1487, 1.4214138
        %v1489 = vmul.f32 %v1488, %v1484
        %v1490 = vadd.f32 %v1489, -0.28449672
        %v1491 = vmul.f32 %v1490, %v1484
        %v1492 = vadd.f32 %v1491, 0.2548296
        %v1493 = vmul.f32 %v1492, %v1484
        %v1494 = vsub.f32 0.0, %v1480
        %v1495 = vmul.f32 %v1494, %v1480
        %v1496 = vmul.f32 %v1495, 1.442695
        %v1497 = vpow.pop %v1496
        %v1498 = vmul.f32 %v1493, %v1497
        %v1499 = vsub.f32 1.0, %v1498
        %v1500 = vmul.f32 %v1479, %v1499
        %v1501 = vadd.f32 %v1500, 1.0
        %v1502 = vmul.f32 %v1476, %v1501
        %v1503 = vld [vmem:[%s11] sm:$0xff]
        %v1504 = vld [vmem:[%s11 + $0x8] sm:$0xff]
        %v1505 = vld [vmem:[%s11 + $0x10] sm:$0xff]
        %v1506 = vld [vmem:[%s11 + $0x18] sm:$0xff]
        %v1507 = vld [vmem:[%s11 + $0x20] sm:$0xff]
        %v1508 = vld [vmem:[%s11 + $0x28] sm:$0xff]
        %v1509 = vld [vmem:[%s11 + $0x30] sm:$0xff]
        %v1510 = vld [vmem:[%s11 + $0x38] sm:$0xff]
        %v1511 = vld [vmem:[%s11 + $0x40] sm:$0xff]
        %v1512 = vld [vmem:[%s11 + $0x48] sm:$0xff]
        %v1513 = vld [vmem:[%s11 + $0x50] sm:$0xff]
        %v1514 = vld [vmem:[%s11 + $0x58] sm:$0xff]
        %v1515 = vld [vmem:[%s11 + $0x60] sm:$0xff]
        %v1516 = vld [vmem:[%s11 + $0x68] sm:$0xff]
        %v1517 = vld [vmem:[%s11 + $0x70] sm:$0xff]
        %v1518 = vld [vmem:[%s11 + $0x78] sm:$0xff]
        %v1519 = vld [vmem:[%s12] sm:$0x1]
        %v1521 = vlaneseq
        %v1522 = vshrl.u32 %v1521, 7
        %v1523 = vsub.s32 0, %v1522
        %v1524 = vrot.slane %v1519, %v1523
        %1526 = vmatprep.subr.mxu0 0.0
        %1527 = vmatpush1.msra.mxu0 %v1503
        %1528 = vmatprep.subr.mxu0 0.0
        %1529 = vmatpush1.msra.mxu0 %v1504
        %1530 = vmatprep.subr.mxu0 0.0
        %1531 = vmatpush1.msra.mxu0 %v1505
        %1532 = vmatprep.subr.mxu0 0.0
        %1533 = vmatpush1.msra.mxu0 %v1506
        %1534 = vmatprep.subr.mxu0 0.0
        %1535 = vmatpush1.msra.mxu0 %v1507
        %1536 = vmatprep.subr.mxu0 0.0
        %1537 = vmatpush1.msra.mxu0 %v1508
        %1538 = vmatprep.subr.mxu0 0.0
        %1539 = vmatpush1.msra.mxu0 %v1509
        %1540 = vmatprep.subr.mxu0 0.0
        %1541 = vmatpush1.msra.mxu0 %v1510
        %1542 = vmatprep.subr.mxu0 0.0
        %1543 = vmatpush1.msra.mxu0 %v1511
        %1544 = vmatprep.subr.mxu0 0.0
        %1545 = vmatpush1.msra.mxu0 %v1512
        %1546 = vmatprep.subr.mxu0 0.0
        %1547 = vmatpush1.msra.mxu0 %v1513
        %1548 = vmatprep.subr.mxu0 0.0
        %1549 = vmatpush1.msra.mxu0 %v1514
        %1550 = vmatprep.subr.mxu0 0.0
        %1551 = vmatpush1.msra.mxu0 %v1515
        %1552 = vmatprep.subr.mxu0 0.0
        %1553 = vmatpush1.msra.mxu0 %v1516
        %1554 = vmatprep.subr.mxu0 0.0
        %1555 = vmatpush1.msra.mxu0 %v1517
        %1556 = vmatprep.subr.mxu0 0.0
        %1557 = vmatpush1.msra.mxu0 %v1518
        %1558 = vmatprep.subr.mxu0 0.0
        %1559 = vmatpush1.msra.mxu0 0.0
        %1560 = vmatprep.subr.mxu0 0.0
        %1561 = vmatpush1.msra.mxu0 0.0
        %1562 = vmatprep.subr.mxu0 0.0
        %1563 = vmatpush1.msra.mxu0 0.0
        %1564 = vmatprep.subr.mxu0 0.0
        %1565 = vmatpush1.msra.mxu0 0.0
        %1566 = vmatprep.subr.mxu0 0.0
        %1567 = vmatpush1.msra.mxu0 0.0
        %1568 = vmatprep.subr.mxu0 0.0
        %1569 = vmatpush1.msra.mxu0 0.0
        %1570 = vmatprep.subr.mxu0 0.0
        %1571 = vmatpush1.msra.mxu0 0.0
        %1572 = vmatprep.subr.mxu0 0.0
        %1573 = vmatpush1.msra.mxu0 0.0
        %1574 = vmatprep.subr.mxu0 0.0
        %1575 = vmatpush1.msra.mxu0 0.0
        %1576 = vmatprep.subr.mxu0 0.0
        %1577 = vmatpush1.msra.mxu0 0.0
        %1578 = vmatprep.subr.mxu0 0.0
        %1579 = vmatpush1.msra.mxu0 0.0
        %1580 = vmatprep.subr.mxu0 0.0
        %1581 = vmatpush1.msra.mxu0 0.0
        %1582 = vmatprep.subr.mxu0 0.0
        %1583 = vmatpush1.msra.mxu0 0.0
        %1584 = vmatprep.subr.mxu0 0.0
        %1585 = vmatpush1.msra.mxu0 0.0
        %1586 = vmatprep.subr.mxu0 0.0
        %1587 = vmatpush1.msra.mxu0 0.0
        %1588 = vmatprep.subr.mxu0 0.0
        %1589 = vmatpush1.msra.mxu0 0.0
        %1590 = vmatprep.mubr.f32.mxu0 0.0
        %1591 = vmatmul.mubr.f32.gmra.mrb[0].mxu0 %v1502
        %v1592 = vpop.f32.mrb[0].mxu0
        %v1593 = vadd.f32 %v1524, %v1592
        %v1594 = vpop.f32.mrb[0].mxu0
        %1595 = vdwg.mxu0
        %v1596 = vadd.f32 %v1362, %v1593
        %1597 = vst.msk [vmem:[%s462] sm:$0xff] %vm475, %v1596
        %s1598 = sand.u32 %s318, 1
        %s1599 = scalar_lea.sflag [#allocation3], %s1598
        %s1600 = sand.u32 %s318, 1
        %s1601 = smul.addr %s1600, 8
        %s1602 = scalar_lea.vmem [#allocation2], %s1601
        %s1603 = sand.u32 %s344, 1
        %s1604 = scalar_lea.sflag [#allocation5], %s1603
        %s1605 = sand.u32 %s344, 1
        %s1606 = smul.addr %s1605, 32
        %s1607 = scalar_lea.vmem [#allocation4], %s1606
        // Predicated region
        $region73: #{tpu_custom_call.1} parent=71 // pred_check
          %p1608 = pneg %p328
        $region74: #{tpu_custom_call.1} parent=71 // pred_check_branch
          %1610 = sbr.rel (%p1608) target = $region76
        $region75: #{tpu_custom_call.1} parent=71 // pred_region
          %s1612 = ssub.s32 128, 128
          %1613 = vsyncadd %s1599, %s1612
          %s1614 = smul.addr %s32, 128
          %s1615 = scalar_lea.hbm %s13, %s1614
          %s1617 = sshll.u32 %s1602, 4
          %s1618 = int_to_ptr.vmem [resolvable:$true] %s1617
          %1620 = dma.vmem_to_hbm [thread:$0]  %s1618, 128, %s1615, %s1599
        $region76: #{tpu_custom_call.1} parent=71 // pred_fallthru
          _
        // Predicated region
        $region77: #{tpu_custom_call.1} parent=71 // pred_check
          %p1621 = pneg %p354
        $region78: #{tpu_custom_call.1} parent=71 // pred_check_branch
          %1623 = sbr.rel (%p1621) target = $region80
        $region79: #{tpu_custom_call.1} parent=71 // pred_region
          %s1625 = ssub.s32 512, 512
          %1626 = vsyncadd %s1604, %s1625
          %s1627 = smul.addr %s32, 4
          %s1628 = smul.addr %s1627, 128
          %s1629 = scalar_lea.hbm %s14, %s1628
          %s1630 = sshll.u32 %s1607, 4
          %s1631 = int_to_ptr.vmem [resolvable:$true] %s1630
          %1636 = dma.vmem_to_hbm [thread:$0]  %s1631, 512, %s1629, %s1604, 128, 128, 8
        $region80: #{tpu_custom_call.1} parent=71 // pred_fallthru
          _
      $region72: #{tpu_custom_call.1} parent=5 // pred_fallthru
        _
      %p1637 = scmp.le.s32.totalorder 2, %s27
      // Predicated region
      $region81: #{tpu_custom_call.1} parent=5 // pred_check
        %p1638 = pneg %p1637
      $region82: #{tpu_custom_call.1} parent=5 // pred_check_branch
        %1640 = sbr.rel (%p1638) target = $region84
      $region83: #{tpu_custom_call.1} parent=5 // pred_region
        %s1641 = ssub.s32 %s27, 2
        // Predicated region
        $region85: #{tpu_custom_call.1} parent=83 // pred_check
          %p1642 = pneg %p334
        $region86: #{tpu_custom_call.1} parent=83 // pred_check_branch
          %1644 = sbr.rel (%p1642) target = $region88
        $region87: #{tpu_custom_call.1} parent=83 // pred_region
          %s1645 = sand.u32 %s319, 1
          %s1646 = scalar_lea.sflag [#allocation3], %s1645
          %s1647 = sand.u32 %s319, 1
          %s1648 = smul.addr %s1647, 8
          %s1649 = scalar_lea.vmem [#allocation2], %s1648
          %1650 = dma.done %s1646, 128
        $region88: #{tpu_custom_call.1} parent=83 // pred_fallthru
          _
        // Predicated region
        $region89: #{tpu_custom_call.1} parent=83 // pred_check
          %p1651 = pneg %p360
        $region90: #{tpu_custom_call.1} parent=83 // pred_check_branch
          %1653 = sbr.rel (%p1651) target = $region92
        $region91: #{tpu_custom_call.1} parent=83 // pred_region
          %s1654 = sand.u32 %s345, 1
          %s1655 = scalar_lea.sflag [#allocation5], %s1654
          %s1656 = sand.u32 %s345, 1
          %s1657 = smul.addr %s1656, 32
          %s1658 = scalar_lea.vmem [#allocation4], %s1657
          %1659 = dma.done %s1655, 512
        $region92: #{tpu_custom_call.1} parent=83 // pred_fallthru
          _
      $region84: #{tpu_custom_call.1} parent=5 // pred_fallthru
        _
    $region6: #{tpu_custom_call.1} parent=1 // loop_footer
      %s31 = sadd.s32 1, %s27
    $region7: #{tpu_custom_call.1} parent=1 // loop_footer_branch
      %26 = sbr.rel target = $region3
    $region8: #{tpu_custom_call.1} parent=1 // loop_exit
      _
    %1660 = vsyncpa [#allocation3], 1
    %s1661 = scalar_lea.sflag [#allocation3], 1
    %1662 = vsyncpa %s1661, 1
    %1663 = vsyncpa [#allocation5], 1
    %s1664 = scalar_lea.sflag [#allocation5], 1
    %1665 = vsyncpa %s1664, 1

</llo_original>
